<compile_context>
chip_gen: v6e
topology: v6e:2x2x1
jax: 0.10.0
libtpu: 0.0.40
codegen_flags: <defaults>
</compile_context>

<pallas_src>
import functools

import jax
import jax.numpy as jnp
from jax import lax
from jax.experimental import pallas as pl
from jax.experimental.pallas import tpu as pltpu


# Max pixel lanes per grid step.  Double-buffered inputs are ~(C+1)*tn*4*2 bytes
# (~5.2 MiB for C=4 f32), well inside the default scoped-VMEM limit everywhere,
# while each step's DMA is large enough that the ~0.35 us per-step overhead is
# negligible even at v7x HBM bandwidth.
_MAX_TN = 131072

# Explicit MXU precision: deterministic pass count across chips (no f32 MXU exists).
# bf16 inputs lower to the native single pass; f32 inputs to the exact decomposition.
_MXU_PRECISION = lax.Precision.HIGHEST


# ----------------------------------------------------------------------------
# Pallas kernel: per-batch Gram statistics of [bands; pan] over pixels
# ----------------------------------------------------------------------------
def _gram_kernel(x_ref, p_ref, g_ref, acc_ref, *,
                 n_pixels, tn, c, n_sub, n_full, needs_mask):
    """x_ref: (c, tn) band tile, p_ref: (1, tn) pan tile, g_ref/acc_ref: (k_pad, k_pad).

    Accumulator layout (upper triangle only; symmetrized in JAX):
      [0:c, 0:c]   band-band Gram           [0:c, c]   band . pan
      [c,   c]     pan . pan                [0:c, c+1] band sums
      [c,   c+1]   pan sum                  [c+1, c+1] valid-pixel count
    """
    s = pl.program_id(1)
    n = pl.program_id(2)

    @pl.when(n == 0)
    def _():
        acc_ref[...] = jnp.zeros_like(acc_ref)

    def accumulate(x, p, cnt):
        # Band-band Gram on the MXU; contract-last-with-last so no transpose/relayout
        # of the (c, tn) tile is needed, precision pinned explicitly.
        xx = lax.dot_general(x, x, (((1,), (1,)), ((), ())),
                             preferred_element_type=jnp.float32,
                             precision=_MXU_PRECISION)
        # Remaining statistics: exact-f32 VPU multiplies + lane reductions (no
        # (k_pad, tn) concatenate / scratch copy per step).
        xf = x.astype(jnp.float32)
        pf = p.astype(jnp.float32)
        xp = jnp.sum(xf * pf, axis=1, keepdims=True)        # (c, 1)
        pp = jnp.sum(pf * pf, axis=1, keepdims=True)        # (1, 1)
        sx = jnp.sum(xf, axis=1, keepdims=True)             # (c, 1)
        sp = jnp.sum(pf, axis=1, keepdims=True)             # (1, 1)
        acc_ref[pl.ds(0, c), pl.ds(0, c)] += xx
        acc_ref[pl.ds(0, c), pl.ds(c, 1)] += xp
        acc_ref[pl.ds(c, 1), pl.ds(c, 1)] += pp
        acc_ref[pl.ds(0, c), pl.ds(c + 1, 1)] += sx
        acc_ref[pl.ds(c, 1), pl.ds(c + 1, 1)] += sp
        acc_ref[pl.ds(c + 1, 1), pl.ds(c + 1, 1)] += cnt

    full_cnt = jnp.full((1, 1), float(tn), jnp.float32)

    if needs_mask:
        g_step = s * n_sub + n          # global pixel-block index

        @pl.when(g_step < n_full)       # fully valid block: no mask work at all
        def _():
            accumulate(x_ref[...], p_ref[...], full_cnt)

        @pl.when(g_step >= n_full)      # ragged tail (or phantom) block
        def _():
            lane = lax.broadcasted_iota(jnp.int32, (1, tn), 1)
            valid = (g_step * tn + lane) < n_pixels          # (1, tn) bool
            # jnp.where (select), not multiply, so undefined out-of-bounds lanes
            # (possibly NaN bit patterns) cannot propagate.
            x = jnp.where(valid, x_ref[...], 0.0)
            p = jnp.where(valid, p_ref[...], 0.0)
            cnt = jnp.sum(valid.astype(jnp.float32), axis=1, keepdims=True)
            accumulate(x, p, cnt)
    else:
        accumulate(x_ref[...], p_ref[...], full_cnt)

    @pl.when(n == n_sub - 1)
    def _():
        g_ref[...] = acc_ref[...]


def gram_and_sums(bands, pan):
    """bands: (B, C, N), pan: (B, 1, N) in their native dtype (f32 or bf16).

    Returns (gram, sums, count), all f32, with K = C + 1 and s = [bands; pan]:
      gram[b, a, d] = sum_j s[b, a, j] * s[b, d, j]
      sums[b, a]    = sum_j s[b, a, j]
      count[b]      = N
    """
    B, C, N = bands.shape
    assert pan.shape == (B, 1, N)
    K = C + 1
    k_pad = max(8, ((C + 2 + 7) // 8) * 8)

    # Pixel-tile width: as large as possible, lane-aligned when N allows, never
    # larger than the array (only the standard ragged-last-block path is used).
    if N > _MAX_TN:
        tn = _MAX_TN
    elif N % 128 == 0 or N < 128:
        tn = N
    else:
        tn = (N // 128) * 128
    n_blocks = pl.cdiv(N, tn)

    # v7x has two TensorCores; for odd / unit batch also split the pixel-block axis
    # so both cores get work (partial Grams are summed below, O(k_pad^2) and free).
    S = 2 if (B % 2 == 1 and n_blocks >= 2) else 1
    n_sub = pl.cdiv(n_blocks, S)
    total = S * n_sub
    needs_mask = (total * tn != N)
    n_full = N // tn                     # number of fully-valid pixel blocks
    clamp = total > n_blocks             # phantom steps exist (odd n_blocks, S=2)

    def pix_block(s, n):
        blk = s * n_sub + n
        if clamp:
            # Phantom steps re-read the last valid block (in-bounds DMA); their
            # contribution is masked to zero in the kernel.
            blk = jnp.minimum(blk, n_blocks - 1)
        return blk

    kernel = functools.partial(
        _gram_kernel, n_pixels=N, tn=tn, c=C,
        n_sub=n_sub, n_full=n_full, needs_mask=needs_mask)

    itemsize = jnp.dtype(bands.dtype).itemsize
    cost = pl.CostEstimate(
        flops=2 * B * (C + 2) * (C + 2) * N,
        transcendentals=0,
        bytes_accessed=B * (C + 1) * N * itemsize + B * S * k_pad * k_pad * 4)

    out = pl.pallas_call(
        kernel,
        out_shape=jax.ShapeDtypeStruct((B, S, k_pad, k_pad), jnp.float32),
        grid_spec=pltpu.PrefetchScalarGridSpec(
            num_scalar_prefetch=0,
            grid=(B, S, n_sub),
            in_specs=[
                pl.BlockSpec((pl.Squeezed(), C, tn),
                             lambda b, s, n: (b, 0, pix_block(s, n))),
                pl.BlockSpec((pl.Squeezed(), 1, tn),
                             lambda b, s, n: (b, 0, pix_block(s, n))),
            ],
            out_specs=pl.BlockSpec(
                (pl.Squeezed(), pl.Squeezed(), k_pad, k_pad),
                lambda b, s, n: (b, s, 0, 0)),
            scratch_shapes=[pltpu.VMEM((k_pad, k_pad), jnp.float32)],
        ),
        compiler_params=pltpu.CompilerParams(
            dimension_semantics=("parallel", "parallel", "arbitrary")),
        cost_estimate=cost,
    )(bands, pan)

    g = jnp.sum(out, axis=1)                                 # merge per-core partials
    upper = g[:, :K, :K]                                     # only upper triangle is filled
    gram = jnp.triu(upper) + jnp.swapaxes(jnp.triu(upper, k=1), 1, 2)
    sums = g[:, :K, C + 1]
    count = g[:, C + 1, C + 1]
    return gram, sums, count


# ----------------------------------------------------------------------------
# QNR math on top of the Gram statistics
# ----------------------------------------------------------------------------
# TODO(synk): Q/UIQI here is computed globally per band pair over the image; the
# standard Wald-protocol QNR uses local sliding windows averaged over the image.
def _q_index_pairs(gram, sums, count, eps=1e-12):
    """Universal Image Quality Index Q(a, b) for all band pairs (incl. pan).

    gram: (B, K, K), sums: (B, K), count: (B,); returns (B, K, K) Q matrix."""
    mu = sums / count[:, None]                       # (B, K) per-band means
    e = gram / count[:, None, None]                  # (B, K, K) E[a*b]
    mu_a = mu[:, :, None]
    mu_b = mu[:, None, :]
    cov = e - mu_a * mu_b                            # biased covariance (cancels)
    var = jnp.diagonal(cov, axis1=1, axis2=2)        # (B, K)
    num = 4.0 * cov * mu_a * mu_b
    den = (var[:, :, None] + var[:, None, :]) * (mu_a ** 2 + mu_b ** 2)
    return num / (den + eps)


def qnr(x_net, ms, pan, pan_lr, alpha=1.0, beta=1.0, p=1.0, q=1.0):
    """QNR per batch item.

    x_net: (B, C, H, W) pansharpened estimate
    ms:    (B, C, H/f, W/f) low-res multispectral measurement
    pan:   (B, 1, H, W) panchromatic measurement
    pan_lr:(B, 1, H/f, W/f) downsampled panchromatic
    """
    B, C, H, W = x_net.shape
    Hl, Wl = ms.shape[2], ms.shape[3]
    n_hi, n_lo = H * W, Hl * Wl

    # No wrapper-side upcast: reshapes are free views, dtype handled in-kernel.
    g_hi, s_hi, c_hi = gram_and_sums(
        x_net.reshape(B, C, n_hi), pan.reshape(B, 1, n_hi))
    g_lo, s_lo, c_lo = gram_and_sums(
        ms.reshape(B, C, n_lo), pan_lr.reshape(B, 1, n_lo))

    q_hi = _q_index_pairs(g_hi, s_hi, c_hi)
    q_lo = _q_index_pairs(g_lo, s_lo, c_lo)

    # D_lambda: spectral distortion over off-diagonal band pairs (C >= 2 only).
    if C > 1:
        off = 1.0 - jnp.eye(C, dtype=jnp.float32)
        diff_ll = jnp.abs(q_hi[:, :C, :C] - q_lo[:, :C, :C]) ** p
        d_lambda = (jnp.sum(diff_ll * off, axis=(1, 2)) / (C * (C - 1))) ** (1.0 / p)
    else:
        d_lambda = jnp.zeros((B,), jnp.float32)

    # D_s: spatial distortion, each band vs the panchromatic image.
    diff_s = jnp.abs(q_hi[:, :C, C] - q_lo[:, :C, C]) ** q
    d_s = jnp.mean(diff_s, axis=1) ** (1.0 / q)

    return (1.0 - d_lambda) ** alpha * (1.0 - d_s) ** beta


# ----------------------------------------------------------------------------
# Pansharpen physics stand-in (deterministic, no learned filters)
# ----------------------------------------------------------------------------
# TODO(synk): deepinv's Pansharpen uses a filtered Downsampling operator and a
# spectral response function; a factor-f average pooling and channel mean are
# used here as a deterministic stand-in with identical shapes.
def pansharpen_forward(x, factor=4):
    B, C, H, W = x.shape
    ms = x.reshape(B, C, H // factor, factor, W // factor, factor).mean(axis=(3, 5))
    pan = x.mean(axis=1, keepdims=True)
    return ms, pan


def downsample(img, factor=4):
    B, C, H, W = img.shape
    return img.reshape(B, C, H // factor, factor, W // factor, factor).mean(axis=(3, 5))


# ----------------------------------------------------------------------------
# QNRLoss.forward equivalent: loss = 1 - QNR(physics)(x_net, y), scalar
# ----------------------------------------------------------------------------
@functools.partial(jax.jit, static_argnames=("factor",))
def qnr_loss(y_ms, y_pan, x_net, factor=4):
    pan_lr = downsample(y_pan, factor)
    score = qnr(x_net, y_ms, y_pan, pan_lr)
    return 1.0 - jnp.mean(score)


if __name__ == "__main__":
    key = jax.random.PRNGKey(0)
    B, C, H, W, factor = 2, 4, 16, 16, 4

    k1, k2, k3 = jax.random.split(key, 3)
    x_gt = jax.random.uniform(k1, (B, C, H, W), dtype=jnp.float32)
    # measurement y from the physics, and an imperfect reconstruction x_net
    y_ms, y_pan = pansharpen_forward(x_gt, factor)
    x_net = jnp.clip(
        x_gt + 0.05 * jax.random.normal(k2, (B, C, H, W), dtype=jnp.float32), 0.0, 1.0
    )

    loss = qnr_loss(y_ms, y_pan, x_net, factor=factor)
    jax.block_until_ready(loss)
    assert loss.shape == () and jnp.isfinite(loss)

    # Self-check of the Pallas Gram statistics against an exact JAX reference on a
    # shape that exercises the ragged-tail mask and the dual-core (S=2) split
    # (B=3 odd, N=400 -> tn=384, two pixel blocks, second one ragged).
    Bc, Cc, Hc, Wc = 3, 4, 20, 20
    xb = jax.random.uniform(k3, (Bc, Cc, Hc * Wc), dtype=jnp.float32)
    pb = jnp.mean(xb, axis=1, keepdims=True)
    gram, sums, count = gram_and_sums(xb, pb)
    sref = jnp.concatenate([xb, pb], axis=1)
    gram_ref = jnp.einsum("ban,bdn->bad", sref, sref,
                          precision=lax.Precision.HIGHEST)
    sums_ref = jnp.sum(sref, axis=2)
    count_ref = jnp.full((Bc,), float(Hc * Wc), jnp.float32)
    jax.block_until_ready((gram, sums, count))
    assert jnp.allclose(gram, gram_ref, rtol=1e-4, atol=1e-3)
    assert jnp.allclose(sums, sums_ref, rtol=1e-4, atol=1e-3)
    assert jnp.allclose(count, count_ref)

    print("KERNEL_OK")
</pallas_src>

<mosaic_0001>
module attributes {stable_mosaic.version = 11 : i64} {
  func.func @_gram_kernel(%arg0: i32, %arg1: i32, %arg2: i32, %arg3: memref<1x4x16xf32, #tpu.memory_space<vmem>>, %arg4: memref<1x1x16xf32, #tpu.memory_space<vmem>>, %arg5: memref<1x1x8x8xf32, #tpu.memory_space<vmem>>, %arg6: memref<8x8xf32, #tpu.memory_space<vmem>>) attributes {dimension_semantics = [#tpu.dimension_semantics<parallel>, #tpu.dimension_semantics<parallel>, #tpu.dimension_semantics<arbitrary>], iteration_bounds = array<i64: 2, 1, 1>, scalar_prefetch = 0 : i64, scratch_operands = 1 : i64, tpu.core_type = #tpu.core_type<tc>, window_params = [{transform_indices = @transform_0, window_bounds = array<i64: 1, 4, 16>}, {transform_indices = @transform_1, window_bounds = array<i64: 1, 1, 16>}, {transform_indices = @transform_2, window_bounds = array<i64: 1, 1, 8, 8>}]} {
    %c0_i32 = arith.constant 0 : i32
    %0 = arith.cmpi eq, %arg2, %c0_i32 : i32
    %1 = arith.extui %0 : i1 to i32
    %c0_i32_0 = arith.constant 0 : i32
    %2 = arith.cmpi ne, %1, %c0_i32_0 : i32
    scf.if %2 {
      %cst_35 = arith.constant 0.000000e+00 : f32
      %41 = vector.broadcast %cst_35 : f32 to vector<8x8xf32>
      %c0_36 = arith.constant 0 : index
      %c0_37 = arith.constant 0 : index
      %42 = vector.load %arg6[%c0_36, %c0_37] : memref<8x8xf32, #tpu.memory_space<vmem>>, vector<8x8xf32>
      tpu.vector_store %arg6[%c0_36, %c0_37], %41 {strides = array<i32>} : memref<8x8xf32, #tpu.memory_space<vmem>>, vector<8x8xf32>,
    } else {
    }
    %cst = arith.constant 1.600000e+01 : f32
    %3 = vector.broadcast %cst : f32 to vector<1x1xf32>
    %c0 = arith.constant 0 : index
    %c0_1 = arith.constant 0 : index
    %c0_2 = arith.constant 0 : index
    %4 = vector.load %arg3[%c0, %c0_1, %c0_2] : memref<1x4x16xf32, #tpu.memory_space<vmem>>, vector<1x4x16xf32>
    %5 = vector.shape_cast %4 : vector<1x4x16xf32> to vector<4x16xf32>
    %c0_3 = arith.constant 0 : index
    %c0_4 = arith.constant 0 : index
    %c0_5 = arith.constant 0 : index
    %6 = vector.load %arg4[%c0_3, %c0_4, %c0_5] : memref<1x1x16xf32, #tpu.memory_space<vmem>>, vector<1x1x16xf32>
    %7 = vector.shape_cast %6 : vector<1x1x16xf32> to vector<1x16xf32>
    %cst_6 = arith.constant dense<0.000000e+00> : vector<4x4xf32>
    %8 = tpu.matmul %5, %5, %cst_6 {dimension_numbers = #tpu.dot_dimension_numbers<[1], [1], [0], [0], [0, 0, 1, 0], [], []>, precision = #tpu.contract_precision<fp32>} : vector<4x16xf32>, vector<4x16xf32>, vector<4x4xf32> -> vector<4x4xf32>
    %9 = vector.broadcast %7 : vector<1x16xf32> to vector<4x16xf32>
    %10 = arith.mulf %5, %9 : vector<4x16xf32>
    %cst_7 = arith.constant dense<0.000000e+00> : vector<4xf32>
    %11 = vector.multi_reduction <add>, %10, %cst_7 [1] : vector<4x16xf32> to vector<4xf32>
    %12 = vector.shape_cast %11 : vector<4xf32> to vector<4x1xf32>
    %13 = arith.mulf %7, %7 : vector<1x16xf32>
    %cst_8 = arith.constant dense<0.000000e+00> : vector<1xf32>
    %14 = vector.multi_reduction <add>, %13, %cst_8 [1] : vector<1x16xf32> to vector<1xf32>
    %15 = vector.shape_cast %14 : vector<1xf32> to vector<1x1xf32>
    %cst_9 = arith.constant dense<0.000000e+00> : vector<4xf32>
    %16 = vector.multi_reduction <add>, %5, %cst_9 [1] : vector<4x16xf32> to vector<4xf32>
    %17 = vector.shape_cast %16 : vector<4xf32> to vector<4x1xf32>
    %cst_10 = arith.constant dense<0.000000e+00> : vector<1xf32>
    %18 = vector.multi_reduction <add>, %7, %cst_10 [1] : vector<1x16xf32> to vector<1xf32>
    %19 = vector.shape_cast %18 : vector<1xf32> to vector<1x1xf32>
    %c0_11 = arith.constant 0 : index
    %c0_12 = arith.constant 0 : index
    %20 = vector.load %arg6[%c0_11, %c0_12] : memref<8x8xf32, #tpu.memory_space<vmem>>, vector<4x4xf32>
    %21 = arith.addf %20, %8 : vector<4x4xf32>
    %c0_13 = arith.constant 0 : index
    %c0_14 = arith.constant 0 : index
    %22 = vector.load %arg6[%c0_13, %c0_14] : memref<8x8xf32, #tpu.memory_space<vmem>>, vector<4x4xf32>
    tpu.vector_store %arg6[%c0_13, %c0_14], %21 {strides = array<i32>} : memref<8x8xf32, #tpu.memory_space<vmem>>, vector<4x4xf32>,
    %c0_15 = arith.constant 0 : index
    %c4 = arith.constant 4 : index
    %23 = vector.load %arg6[%c0_15, %c4] : memref<8x8xf32, #tpu.memory_space<vmem>>, vector<4x1xf32>
    %24 = arith.addf %23, %12 : vector<4x1xf32>
    %c0_16 = arith.constant 0 : index
    %c4_17 = arith.constant 4 : index
    %25 = vector.load %arg6[%c0_16, %c4_17] : memref<8x8xf32, #tpu.memory_space<vmem>>, vector<4x1xf32>
    tpu.vector_store %arg6[%c0_16, %c4_17], %24 {strides = array<i32>} : memref<8x8xf32, #tpu.memory_space<vmem>>, vector<4x1xf32>,
    %c4_18 = arith.constant 4 : index
    %c4_19 = arith.constant 4 : index
    %26 = vector.load %arg6[%c4_18, %c4_19] : memref<8x8xf32, #tpu.memory_space<vmem>>, vector<1x1xf32>
    %27 = arith.addf %26, %15 : vector<1x1xf32>
    %c4_20 = arith.constant 4 : index
    %c4_21 = arith.constant 4 : index
    %28 = vector.load %arg6[%c4_20, %c4_21] : memref<8x8xf32, #tpu.memory_space<vmem>>, vector<1x1xf32>
    tpu.vector_store %arg6[%c4_20, %c4_21], %27 {strides = array<i32>} : memref<8x8xf32, #tpu.memory_space<vmem>>, vector<1x1xf32>,
    %c0_22 = arith.constant 0 : index
    %c5 = arith.constant 5 : index
    %29 = vector.load %arg6[%c0_22, %c5] : memref<8x8xf32, #tpu.memory_space<vmem>>, vector<4x1xf32>
    %30 = arith.addf %29, %17 : vector<4x1xf32>
    %c0_23 = arith.constant 0 : index
    %c5_24 = arith.constant 5 : index
    %31 = vector.load %arg6[%c0_23, %c5_24] : memref<8x8xf32, #tpu.memory_space<vmem>>, vector<4x1xf32>
    tpu.vector_store %arg6[%c0_23, %c5_24], %30 {strides = array<i32>} : memref<8x8xf32, #tpu.memory_space<vmem>>, vector<4x1xf32>,
    %c4_25 = arith.constant 4 : index
    %c5_26 = arith.constant 5 : index
    %32 = vector.load %arg6[%c4_25, %c5_26] : memref<8x8xf32, #tpu.memory_space<vmem>>, vector<1x1xf32>
    %33 = arith.addf %32, %19 : vector<1x1xf32>
    %c4_27 = arith.constant 4 : index
    %c5_28 = arith.constant 5 : index
    %34 = vector.load %arg6[%c4_27, %c5_28] : memref<8x8xf32, #tpu.memory_space<vmem>>, vector<1x1xf32>
    tpu.vector_store %arg6[%c4_27, %c5_28], %33 {strides = array<i32>} : memref<8x8xf32, #tpu.memory_space<vmem>>, vector<1x1xf32>,
    %c5_29 = arith.constant 5 : index
    %c5_30 = arith.constant 5 : index
    %35 = vector.load %arg6[%c5_29, %c5_30] : memref<8x8xf32, #tpu.memory_space<vmem>>, vector<1x1xf32>
    %36 = arith.addf %35, %3 : vector<1x1xf32>
    %c5_31 = arith.constant 5 : index
    %c5_32 = arith.constant 5 : index
    %37 = vector.load %arg6[%c5_31, %c5_32] : memref<8x8xf32, #tpu.memory_space<vmem>>, vector<1x1xf32>
    tpu.vector_store %arg6[%c5_31, %c5_32], %36 {strides = array<i32>} : memref<8x8xf32, #tpu.memory_space<vmem>>, vector<1x1xf32>,
    %c0_i32_33 = arith.constant 0 : i32
    %38 = arith.cmpi eq, %arg2, %c0_i32_33 : i32
    %39 = arith.extui %38 : i1 to i32
    %c0_i32_34 = arith.constant 0 : i32
    %40 = arith.cmpi ne, %39, %c0_i32_34 : i32
    scf.if %40 {
      %c0_35 = arith.constant 0 : index
      %c0_36 = arith.constant 0 : index
      %41 = vector.load %arg6[%c0_35, %c0_36] : memref<8x8xf32, #tpu.memory_space<vmem>>, vector<8x8xf32>
      %c0_37 = arith.constant 0 : index
      %c0_38 = arith.constant 0 : index
      %c0_39 = arith.constant 0 : index
      %c0_40 = arith.constant 0 : index
      %42 = vector.load %arg5[%c0_37, %c0_38, %c0_39, %c0_40] : memref<1x1x8x8xf32, #tpu.memory_space<vmem>>, vector<1x1x8x8xf32>
      %43 = vector.shape_cast %42 : vector<1x1x8x8xf32> to vector<8x8xf32>
      %44 = vector.shape_cast %41 : vector<8x8xf32> to vector<1x1x8x8xf32>
      tpu.vector_store %arg5[%c0_37, %c0_38, %c0_39, %c0_40], %44 {strides = array<i32>} : memref<1x1x8x8xf32, #tpu.memory_space<vmem>>, vector<1x1x8x8xf32>,
    } else {
    }
    return
  }
  func.func @transform_0(%arg0: i32, %arg1: i32, %arg2: i32) -> (i32, i32, i32) {
    %c1_i32 = arith.constant 1 : i32
    %0 = arith.muli %arg1, %c1_i32 : i32
    %1 = arith.addi %0, %arg2 : i32
    %c0_i32 = arith.constant 0 : i32
    %c0_i32_0 = arith.constant 0 : i32
    return %arg0, %c0_i32, %1 : i32, i32, i32
  }
  func.func @transform_1(%arg0: i32, %arg1: i32, %arg2: i32) -> (i32, i32, i32) {
    %c1_i32 = arith.constant 1 : i32
    %0 = arith.muli %arg1, %c1_i32 : i32
    %1 = arith.addi %0, %arg2 : i32
    %c0_i32 = arith.constant 0 : i32
    %c0_i32_0 = arith.constant 0 : i32
    return %arg0, %c0_i32, %1 : i32, i32, i32
  }
  func.func @transform_2(%arg0: i32, %arg1: i32, %arg2: i32) -> (i32, i32, i32, i32) {
    %c0_i32 = arith.constant 0 : i32
    %c0_i32_0 = arith.constant 0 : i32
    %c0_i32_1 = arith.constant 0 : i32
    return %arg0, %arg1, %c0_i32, %c0_i32_0 : i32, i32, i32, i32
  }
}

module attributes {stable_mosaic.version = 11 : i64} {
  func.func @_gram_kernel(%arg0: i32, %arg1: i32, %arg2: i32, %arg3: memref<1x4x256xf32, #tpu.memory_space<vmem>>, %arg4: memref<1x1x256xf32, #tpu.memory_space<vmem>>, %arg5: memref<1x1x8x8xf32, #tpu.memory_space<vmem>>, %arg6: memref<8x8xf32, #tpu.memory_space<vmem>>) attributes {dimension_semantics = [#tpu.dimension_semantics<parallel>, #tpu.dimension_semantics<parallel>, #tpu.dimension_semantics<arbitrary>], iteration_bounds = array<i64: 2, 1, 1>, scalar_prefetch = 0 : i64, scratch_operands = 1 : i64, tpu.core_type = #tpu.core_type<tc>, window_params = [{transform_indices = @transform_0, window_bounds = array<i64: 1, 4, 256>}, {transform_indices = @transform_1, window_bounds = array<i64: 1, 1, 256>}, {transform_indices = @transform_2, window_bounds = array<i64: 1, 1, 8, 8>}]} {
    %c0_i32 = arith.constant 0 : i32
    %0 = arith.cmpi eq, %arg2, %c0_i32 : i32
    %1 = arith.extui %0 : i1 to i32
    %c0_i32_0 = arith.constant 0 : i32
    %2 = arith.cmpi ne, %1, %c0_i32_0 : i32
    scf.if %2 {
      %cst_35 = arith.constant 0.000000e+00 : f32
      %41 = vector.broadcast %cst_35 : f32 to vector<8x8xf32>
      %c0_36 = arith.constant 0 : index
      %c0_37 = arith.constant 0 : index
      %42 = vector.load %arg6[%c0_36, %c0_37] : memref<8x8xf32, #tpu.memory_space<vmem>>, vector<8x8xf32>
      tpu.vector_store %arg6[%c0_36, %c0_37], %41 {strides = array<i32>} : memref<8x8xf32, #tpu.memory_space<vmem>>, vector<8x8xf32>,
    } else {
    }
    %cst = arith.constant 2.560000e+02 : f32
    %3 = vector.broadcast %cst : f32 to vector<1x1xf32>
    %c0 = arith.constant 0 : index
    %c0_1 = arith.constant 0 : index
    %c0_2 = arith.constant 0 : index
    %4 = vector.load %arg3[%c0, %c0_1, %c0_2] : memref<1x4x256xf32, #tpu.memory_space<vmem>>, vector<1x4x256xf32>
    %5 = vector.shape_cast %4 : vector<1x4x256xf32> to vector<4x256xf32>
    %c0_3 = arith.constant 0 : index
    %c0_4 = arith.constant 0 : index
    %c0_5 = arith.constant 0 : index
    %6 = vector.load %arg4[%c0_3, %c0_4, %c0_5] : memref<1x1x256xf32, #tpu.memory_space<vmem>>, vector<1x1x256xf32>
    %7 = vector.shape_cast %6 : vector<1x1x256xf32> to vector<1x256xf32>
    %cst_6 = arith.constant dense<0.000000e+00> : vector<4x4xf32>
    %8 = tpu.matmul %5, %5, %cst_6 {dimension_numbers = #tpu.dot_dimension_numbers<[1], [1], [0], [0], [0, 0, 1, 0], [], []>, precision = #tpu.contract_precision<fp32>} : vector<4x256xf32>, vector<4x256xf32>, vector<4x4xf32> -> vector<4x4xf32>
    %9 = vector.broadcast %7 : vector<1x256xf32> to vector<4x256xf32>
    %10 = arith.mulf %5, %9 : vector<4x256xf32>
    %cst_7 = arith.constant dense<0.000000e+00> : vector<4xf32>
    %11 = vector.multi_reduction <add>, %10, %cst_7 [1] : vector<4x256xf32> to vector<4xf32>
    %12 = vector.shape_cast %11 : vector<4xf32> to vector<4x1xf32>
    %13 = arith.mulf %7, %7 : vector<1x256xf32>
    %cst_8 = arith.constant dense<0.000000e+00> : vector<1xf32>
    %14 = vector.multi_reduction <add>, %13, %cst_8 [1] : vector<1x256xf32> to vector<1xf32>
    %15 = vector.shape_cast %14 : vector<1xf32> to vector<1x1xf32>
    %cst_9 = arith.constant dense<0.000000e+00> : vector<4xf32>
    %16 = vector.multi_reduction <add>, %5, %cst_9 [1] : vector<4x256xf32> to vector<4xf32>
    %17 = vector.shape_cast %16 : vector<4xf32> to vector<4x1xf32>
    %cst_10 = arith.constant dense<0.000000e+00> : vector<1xf32>
    %18 = vector.multi_reduction <add>, %7, %cst_10 [1] : vector<1x256xf32> to vector<1xf32>
    %19 = vector.shape_cast %18 : vector<1xf32> to vector<1x1xf32>
    %c0_11 = arith.constant 0 : index
    %c0_12 = arith.constant 0 : index
    %20 = vector.load %arg6[%c0_11, %c0_12] : memref<8x8xf32, #tpu.memory_space<vmem>>, vector<4x4xf32>
    %21 = arith.addf %20, %8 : vector<4x4xf32>
    %c0_13 = arith.constant 0 : index
    %c0_14 = arith.constant 0 : index
    %22 = vector.load %arg6[%c0_13, %c0_14] : memref<8x8xf32, #tpu.memory_space<vmem>>, vector<4x4xf32>
    tpu.vector_store %arg6[%c0_13, %c0_14], %21 {strides = array<i32>} : memref<8x8xf32, #tpu.memory_space<vmem>>, vector<4x4xf32>,
    %c0_15 = arith.constant 0 : index
    %c4 = arith.constant 4 : index
    %23 = vector.load %arg6[%c0_15, %c4] : memref<8x8xf32, #tpu.memory_space<vmem>>, vector<4x1xf32>
    %24 = arith.addf %23, %12 : vector<4x1xf32>
    %c0_16 = arith.constant 0 : index
    %c4_17 = arith.constant 4 : index
    %25 = vector.load %arg6[%c0_16, %c4_17] : memref<8x8xf32, #tpu.memory_space<vmem>>, vector<4x1xf32>
    tpu.vector_store %arg6[%c0_16, %c4_17], %24 {strides = array<i32>} : memref<8x8xf32, #tpu.memory_space<vmem>>, vector<4x1xf32>,
    %c4_18 = arith.constant 4 : index
    %c4_19 = arith.constant 4 : index
    %26 = vector.load %arg6[%c4_18, %c4_19] : memref<8x8xf32, #tpu.memory_space<vmem>>, vector<1x1xf32>
    %27 = arith.addf %26, %15 : vector<1x1xf32>
    %c4_20 = arith.constant 4 : index
    %c4_21 = arith.constant 4 : index
    %28 = vector.load %arg6[%c4_20, %c4_21] : memref<8x8xf32, #tpu.memory_space<vmem>>, vector<1x1xf32>
    tpu.vector_store %arg6[%c4_20, %c4_21], %27 {strides = array<i32>} : memref<8x8xf32, #tpu.memory_space<vmem>>, vector<1x1xf32>,
    %c0_22 = arith.constant 0 : index
    %c5 = arith.constant 5 : index
    %29 = vector.load %arg6[%c0_22, %c5] : memref<8x8xf32, #tpu.memory_space<vmem>>, vector<4x1xf32>
    %30 = arith.addf %29, %17 : vector<4x1xf32>
    %c0_23 = arith.constant 0 : index
    %c5_24 = arith.constant 5 : index
    %31 = vector.load %arg6[%c0_23, %c5_24] : memref<8x8xf32, #tpu.memory_space<vmem>>, vector<4x1xf32>
    tpu.vector_store %arg6[%c0_23, %c5_24], %30 {strides = array<i32>} : memref<8x8xf32, #tpu.memory_space<vmem>>, vector<4x1xf32>,
    %c4_25 = arith.constant 4 : index
    %c5_26 = arith.constant 5 : index
    %32 = vector.load %arg6[%c4_25, %c5_26] : memref<8x8xf32, #tpu.memory_space<vmem>>, vector<1x1xf32>
    %33 = arith.addf %32, %19 : vector<1x1xf32>
    %c4_27 = arith.constant 4 : index
    %c5_28 = arith.constant 5 : index
    %34 = vector.load %arg6[%c4_27, %c5_28] : memref<8x8xf32, #tpu.memory_space<vmem>>, vector<1x1xf32>
    tpu.vector_store %arg6[%c4_27, %c5_28], %33 {strides = array<i32>} : memref<8x8xf32, #tpu.memory_space<vmem>>, vector<1x1xf32>,
    %c5_29 = arith.constant 5 : index
    %c5_30 = arith.constant 5 : index
    %35 = vector.load %arg6[%c5_29, %c5_30] : memref<8x8xf32, #tpu.memory_space<vmem>>, vector<1x1xf32>
    %36 = arith.addf %35, %3 : vector<1x1xf32>
    %c5_31 = arith.constant 5 : index
    %c5_32 = arith.constant 5 : index
    %37 = vector.load %arg6[%c5_31, %c5_32] : memref<8x8xf32, #tpu.memory_space<vmem>>, vector<1x1xf32>
    tpu.vector_store %arg6[%c5_31, %c5_32], %36 {strides = array<i32>} : memref<8x8xf32, #tpu.memory_space<vmem>>, vector<1x1xf32>,
    %c0_i32_33 = arith.constant 0 : i32
    %38 = arith.cmpi eq, %arg2, %c0_i32_33 : i32
    %39 = arith.extui %38 : i1 to i32
    %c0_i32_34 = arith.constant 0 : i32
    %40 = arith.cmpi ne, %39, %c0_i32_34 : i32
    scf.if %40 {
      %c0_35 = arith.constant 0 : index
      %c0_36 = arith.constant 0 : index
      %41 = vector.load %arg6[%c0_35, %c0_36] : memref<8x8xf32, #tpu.memory_space<vmem>>, vector<8x8xf32>
      %c0_37 = arith.constant 0 : index
      %c0_38 = arith.constant 0 : index
      %c0_39 = arith.constant 0 : index
      %c0_40 = arith.constant 0 : index
      %42 = vector.load %arg5[%c0_37, %c0_38, %c0_39, %c0_40] : memref<1x1x8x8xf32, #tpu.memory_space<vmem>>, vector<1x1x8x8xf32>
      %43 = vector.shape_cast %42 : vector<1x1x8x8xf32> to vector<8x8xf32>
      %44 = vector.shape_cast %41 : vector<8x8xf32> to vector<1x1x8x8xf32>
      tpu.vector_store %arg5[%c0_37, %c0_38, %c0_39, %c0_40], %44 {strides = array<i32>} : memref<1x1x8x8xf32, #tpu.memory_space<vmem>>, vector<1x1x8x8xf32>,
    } else {
    }
    return
  }
  func.func @transform_0(%arg0: i32, %arg1: i32, %arg2: i32) -> (i32, i32, i32) {
    %c1_i32 = arith.constant 1 : i32
    %0 = arith.muli %arg1, %c1_i32 : i32
    %1 = arith.addi %0, %arg2 : i32
    %c0_i32 = arith.constant 0 : i32
    %c0_i32_0 = arith.constant 0 : i32
    return %arg0, %c0_i32, %1 : i32, i32, i32
  }
  func.func @transform_1(%arg0: i32, %arg1: i32, %arg2: i32) -> (i32, i32, i32) {
    %c1_i32 = arith.constant 1 : i32
    %0 = arith.muli %arg1, %c1_i32 : i32
    %1 = arith.addi %0, %arg2 : i32
    %c0_i32 = arith.constant 0 : i32
    %c0_i32_0 = arith.constant 0 : i32
    return %arg0, %c0_i32, %1 : i32, i32, i32
  }
  func.func @transform_2(%arg0: i32, %arg1: i32, %arg2: i32) -> (i32, i32, i32, i32) {
    %c0_i32 = arith.constant 0 : i32
    %c0_i32_0 = arith.constant 0 : i32
    %c0_i32_1 = arith.constant 0 : i32
    return %arg0, %arg1, %c0_i32, %c0_i32_0 : i32, i32, i32, i32
  }
}

</mosaic_0001>

<llo_original>
// kernel: qnr_loss.3
$region0: #{qnr_loss.3}
  #allocation0 [shape = 'u32[]', space=smem, size = 0x4, offset = 0x4, fixed_abs, tag = 'smem constant byte address 0x4 - core index']
  #allocation1 [shape = 'u32[144,128]{1,0:T(1,128)}', space=vmem, size = 0x12000, scoped, tag = 'internal scratch']
  #allocation2 [shape = 'f32[8,8]{1,0:T(8,128)}', space=vmem, size = 0x1000, scoped, tag = 'scratch operand']
  %s0 = inlined_call_operand.vmem [shape: f32[2,4,16], index: 0, kind: input, shape index: {}]
  %s1 = inlined_call_operand.vmem [shape: f32[2,1,16], index: 1, kind: input, shape index: {}]
  %s2 = inlined_call_operand.vmem [shape: f32[2,1,8,8], index: 2, kind: output, shape index: {}]
  %s3 = sld [smem:[#allocation0]]
  $region49: #{qnr_loss.3} parent=0
    _
  %s5 = ssub.s32 1, %s3
  %s6 = scalar_select 0, %s5, %s3
  loop: start=0, step=1, limit=4
  $region2: #{qnr_loss.3} parent=0 // loop_pre_header
    _
  $region3: #{qnr_loss.3} parent=0 // loop_header
    %s8 = sphi 0, %s12
    %p9 = scmp.ge.s32.totalorder %s8, 4
    %s15 = sphi 0, %s34
    %s16 = sphi 0, %s30
    %s17 = sphi 0, %s26
    %s18 = sphi 0, %s15
    %s19 = sphi 0, %s16
    %s20 = sphi 0, %s17
    %s21 = sphi 0, %s18
    %s22 = sphi 0, %s19
    %s23 = sphi 0, %s20
    %s41 = sphi 0, %s43
    %s44 = sphi 0, %s41
    %s45 = sphi 0, %s44
    %s61 = sphi 0, %s45
    %s71 = sphi 0, %s73
    %s74 = sphi 0, %s71
    %s75 = sphi 0, %s74
    %s91 = sphi 0, %s75
    %s99 = sphi 0, %s101
    %s102 = sphi 0, %s99
    %s103 = sphi 0, %s102
    %s119 = sphi 0, %s103
  $region4: #{qnr_loss.3} parent=0 // loop_header_branch
    %11 = sbr.rel (%p9) target = $region8
  $region5: #{qnr_loss.3} parent=0 // loop_body
    %s13 = ssub.s32 %s8, 1
    %s14 = ssub.s32 %s8, 2
    %s24 = sadd.s32 1, %s17
    %p25 = scmp.ge.s32.totalorder %s24, 1
    %s26 = scalar_select %p25, 0, %s24
    %s27 = sadd.s32 1, %s16
    %s28 = scalar_select %p25, %s27, %s16
    %p29 = scmp.ge.s32.totalorder %s28, 1
    %s30 = scalar_select %p29, 0, %s28
    %s31 = sadd.s32 1, %s15
    %s32 = scalar_select %p29, %s31, %s15
    %p33 = scmp.ge.s32.totalorder %s32, 2
    %s34 = scalar_select %p33, 0, %s32
    %s35 = sadd.s32 %s16, %s17
    %s36 = sadd.s32 %s30, %s26
    %s37 = ssub.s32 %s15, %s34
    %s38 = ssub.s32 %s35, %s36
    %s39 = sor.u32 %s37, %s38
    %p40 = scmp.eq.s32.totalorder %s39, 0
    %s42 = sadd.s32 %s41, 1
    %s43 = scalar_select %p40, %s41, %s42
    %p46 = pneg %p40
    %p47 = scmp.eq.s32.totalorder %s8, 1
    %p48 = por %p46, %p47
    %p49 = scmp.ne.s32.totalorder %s41, %s44
    %p50 = scmp.eq.s32.totalorder %s8, 0
    %p51 = por %p49, %p50
    %p52 = scmp.ne.s32.totalorder %s41, %s44
    %p53 = scmp.eq.s32.totalorder %s13, 1
    %p54 = por %p52, %p53
    %p55 = scmp.ne.s32.totalorder %s44, %s45
    %p56 = scmp.eq.s32.totalorder %s13, 0
    %p57 = por %p55, %p56
    %p58 = scmp.ne.s32.totalorder %s44, %s45
    %p59 = scmp.eq.s32.totalorder %s14, 1
    %p60 = por %p58, %p59
    %p62 = scmp.ne.s32.totalorder %s45, %s61
    %p63 = scmp.eq.s32.totalorder %s14, 0
    %p64 = por %p62, %p63
    %s65 = sadd.s32 %s16, %s17
    %s66 = sadd.s32 %s30, %s26
    %s67 = ssub.s32 %s15, %s34
    %s68 = ssub.s32 %s65, %s66
    %s69 = sor.u32 %s67, %s68
    %p70 = scmp.eq.s32.totalorder %s69, 0
    %s72 = sadd.s32 %s71, 1
    %s73 = scalar_select %p70, %s71, %s72
    %p76 = pneg %p70
    %p77 = scmp.eq.s32.totalorder %s8, 1
    %p78 = por %p76, %p77
    %p79 = scmp.ne.s32.totalorder %s71, %s74
    %p80 = scmp.eq.s32.totalorder %s8, 0
    %p81 = por %p79, %p80
    %p82 = scmp.ne.s32.totalorder %s71, %s74
    %p83 = scmp.eq.s32.totalorder %s13, 1
    %p84 = por %p82, %p83
    %p85 = scmp.ne.s32.totalorder %s74, %s75
    %p86 = scmp.eq.s32.totalorder %s13, 0
    %p87 = por %p85, %p86
    %p88 = scmp.ne.s32.totalorder %s74, %s75
    %p89 = scmp.eq.s32.totalorder %s14, 1
    %p90 = por %p88, %p89
    %p92 = scmp.ne.s32.totalorder %s75, %s91
    %p93 = scmp.eq.s32.totalorder %s14, 0
    %p94 = por %p92, %p93
    %s95 = ssub.s32 %s15, %s34
    %s96 = ssub.s32 %s16, %s30
    %s97 = sor.u32 %s95, %s96
    %p98 = scmp.eq.s32.totalorder %s97, 0
    %s100 = sadd.s32 %s99, 1
    %s101 = scalar_select %p98, %s99, %s100
    %p104 = pneg %p98
    %p105 = scmp.eq.s32.totalorder %s8, 1
    %p106 = por %p104, %p105
    %p107 = scmp.ne.s32.totalorder %s99, %s102
    %p108 = scmp.eq.s32.totalorder %s8, 0
    %p109 = por %p107, %p108
    %p110 = scmp.ne.s32.totalorder %s99, %s102
    %p111 = scmp.eq.s32.totalorder %s13, 1
    %p112 = por %p110, %p111
    %p113 = scmp.ne.s32.totalorder %s102, %s103
    %p114 = scmp.eq.s32.totalorder %s13, 0
    %p115 = por %p113, %p114
    %p116 = scmp.ne.s32.totalorder %s102, %s103
    %p117 = scmp.eq.s32.totalorder %s14, 1
    %p118 = por %p116, %p117
    %p120 = scmp.ne.s32.totalorder %s103, %s119
    %p121 = scmp.eq.s32.totalorder %s14, 0
    %p122 = por %p120, %p121
    %p123 = scmp.le.s32.totalorder 1, %s8
    %p124 = scmp.lt.s32.totalorder %s8, 3
    %p125 = pnand %p123, %p124
    %p126 = pneg %p125
    // Predicated region
    $region9: #{qnr_loss.3} parent=5 // pred_check
      _
    $region10: #{qnr_loss.3} parent=5 // pred_check_branch
      %128 = sbr.rel (%p125) target = $region12
    $region11: #{qnr_loss.3} parent=5 // pred_region
      %s129 = ssub.s32 %s8, 1
    $region12: #{qnr_loss.3} parent=5 // pred_fallthru
      _
    %p130 = scmp.lt.s32.totalorder %s8, 2
    // Predicated region
    $region13: #{qnr_loss.3} parent=5 // pred_check
      %p131 = pneg %p130
    $region14: #{qnr_loss.3} parent=5 // pred_check_branch
      %133 = sbr.rel (%p131) target = $region16
    $region15: #{qnr_loss.3} parent=5 // pred_region
      // Predicated region
      $region17: #{qnr_loss.3} parent=15 // pred_check
        %p134 = pneg %p51
      $region18: #{qnr_loss.3} parent=15 // pred_check_branch
        %136 = sbr.rel (%p134) target = $region20
      $region19: #{qnr_loss.3} parent=15 // pred_region
        %s137 = sadd.s32 %s16, %s17
        %p138 = scmp.lt.s32.totalorder %s15, 1
        %s139 = scalar_select %p138, %s15, 1
        %p140 = scmp.lt.s32.totalorder %s137, 0
        %s141 = scalar_select %p140, %s137, 0
        %s142 = sadd.s32 %s141, %s139
        %s143 = smul.addr %s142, 4
        %s144 = scalar_lea.vmem %s0, %s143
        %s145 = sadd.s32 %s16, %s17
      $region20: #{qnr_loss.3} parent=15 // pred_fallthru
        _
      // Predicated region
      $region21: #{qnr_loss.3} parent=15 // pred_check
        %p146 = pneg %p81
      $region22: #{qnr_loss.3} parent=15 // pred_check_branch
        %148 = sbr.rel (%p146) target = $region24
      $region23: #{qnr_loss.3} parent=15 // pred_region
        %s149 = sadd.s32 %s16, %s17
        %p150 = scmp.lt.s32.totalorder %s15, 1
        %s151 = scalar_select %p150, %s15, 1
        %p152 = scmp.lt.s32.totalorder %s149, 0
        %s153 = scalar_select %p152, %s149, 0
        %s154 = sadd.s32 %s153, %s151
        %s155 = scalar_lea.vmem %s1, %s154
        %s156 = sadd.s32 %s16, %s17
      $region24: #{qnr_loss.3} parent=15 // pred_fallthru
        _
    $region16: #{qnr_loss.3} parent=5 // pred_fallthru
      _
    %p157 = scmp.le.s32.totalorder 1, %s8
    %p158 = scmp.lt.s32.totalorder %s8, 3
    %p159 = pnand %p157, %p158
    %p160 = pneg %p159
    // Predicated region
    $region25: #{qnr_loss.3} parent=5 // pred_check
      _
    $region26: #{qnr_loss.3} parent=5 // pred_check_branch
      %162 = sbr.rel (%p159) target = $region28
    $region27: #{qnr_loss.3} parent=5 // pred_region
      %s163 = ssub.s32 %s8, 1
      %s164 = sadd.s32 %s19, %s20
      %p165 = scmp.lt.s32.totalorder %s18, 1
      %s166 = scalar_select %p165, %s18, 1
      %p167 = scmp.lt.s32.totalorder %s164, 0
      %s168 = scalar_select %p167, %s164, 0
      %s169 = sadd.s32 %s168, %s166
      %s170 = smul.addr %s169, 4
      %s171 = scalar_lea.vmem %s0, %s170
      %p172 = pneg %p57
      %p173 = pneg %p54
      %s174 = sadd.s32 %s19, %s20
      %p175 = scmp.lt.s32.totalorder %s18, 1
      %s176 = scalar_select %p175, %s18, 1
      %p177 = scmp.lt.s32.totalorder %s174, 0
      %s178 = scalar_select %p177, %s174, 0
      %s179 = sadd.s32 %s178, %s176
      %s180 = scalar_lea.vmem %s1, %s179
      %p181 = pneg %p87
      %p182 = pneg %p84
      %p183 = pneg %p115
      %p184 = pneg %p112
      %p185 = scmp.lt.s32.totalorder %s18, 1
      %s186 = scalar_select %p185, %s18, 1
      %p187 = scmp.lt.s32.totalorder %s19, 0
      %s188 = scalar_select %p187, %s19, 0
      %s189 = sadd.s32 %s188, %s186
      %s190 = smul.addr %s189, 8
      %s191 = scalar_lea.vmem %s2, %s190
      %s192 = sadd.s32 %s19, %s20
      %p193 = scmp.lt.s32.totalorder %s18, 1
      %s194 = scalar_select %p193, %s18, 1
      %p195 = scmp.lt.s32.totalorder %s192, 0
      %s196 = scalar_select %p195, %s192, 0
      %s197 = sadd.s32 %s196, %s194
      %s198 = smul.addr %s197, 4
      %s199 = scalar_lea.vmem %s0, %s198
      %s200 = sadd.s32 %s19, %s20
      %s201 = sadd.s32 %s19, %s20
      %p202 = scmp.lt.s32.totalorder %s18, 1
      %s203 = scalar_select %p202, %s18, 1
      %p204 = scmp.lt.s32.totalorder %s201, 0
      %s205 = scalar_select %p204, %s201, 0
      %s206 = sadd.s32 %s205, %s203
      %s207 = scalar_lea.vmem %s1, %s206
      %s208 = sadd.s32 %s19, %s20
      %p209 = scmp.lt.s32.totalorder %s18, 1
      %s210 = scalar_select %p209, %s18, 1
      %p211 = scmp.lt.s32.totalorder %s19, 0
      %s212 = scalar_select %p211, %s19, 0
      %s213 = sadd.s32 %s212, %s210
      %s214 = smul.addr %s213, 8
      %s215 = scalar_lea.vmem %s2, %s214
      %p216 = scmp.eq.s32.totalorder %s20, 0
      // Predicated region
      $region29: #{qnr_loss.3} parent=27 // pred_check
        %p217 = pneg %p216
      $region30: #{qnr_loss.3} parent=27 // pred_check_branch
        %219 = sbr.rel (%p217) target = $region32
      $region31: #{qnr_loss.3} parent=27 // pred_region
        %vm220 = vcmask 64512
        %221 = vst.msk [vmem:[#allocation2] sm:$0xff] %vm220, 0.0
      $region32: #{qnr_loss.3} parent=27 // pred_fallthru
        _
      %v222 = vld [vmem:[%s199] sm:$0xf]
      %v223 = vld [vmem:[%s207] sm:$0x1]
      %vm224 = vcmask 130048
      %v226 = vsel %vm224, %v222, 0
      %228 = vmatprep.subr.mxu0 0.0
      %229 = vmatpush1.xpose.msra.mxu0 0.0
      %230 = vmatprep.subr.mxu0 0.0
      %231 = vmatpush1.xpose.msra.mxu0 0.0
      %232 = vmatprep.subr.mxu0 0.0
      %233 = vmatpush1.xpose.msra.mxu0 0.0
      %234 = vmatprep.subr.mxu0 0.0
      %235 = vmatpush1.xpose.msra.mxu0 0.0
      %236 = vmatprep.subr.mxu0 0.0
      %237 = vmatpush1.xpose.msra.mxu0 0.0
      %238 = vmatprep.subr.mxu0 0.0
      %239 = vmatpush1.xpose.msra.mxu0 0.0
      %240 = vmatprep.subr.mxu0 0.0
      %241 = vmatpush1.xpose.msra.mxu0 0.0
      %242 = vmatprep.subr.mxu0 0.0
      %243 = vmatpush1.xpose.msra.mxu0 0.0
      %244 = vmatprep.subr.mxu0 0.0
      %245 = vmatpush1.xpose.msra.mxu0 0.0
      %246 = vmatprep.subr.mxu0 0.0
      %247 = vmatpush1.xpose.msra.mxu0 0.0
      %248 = vmatprep.subr.mxu0 0.0
      %249 = vmatpush1.xpose.msra.mxu0 0.0
      %250 = vmatprep.subr.mxu0 0.0
      %251 = vmatpush1.xpose.msra.mxu0 0.0
      %252 = vmatprep.subr.mxu0 0.0
      %253 = vmatpush1.xpose.msra.mxu0 0.0
      %254 = vmatprep.subr.mxu0 0.0
      %255 = vmatpush1.xpose.msra.mxu0 0.0
      %256 = vmatprep.subr.mxu0 0.0
      %257 = vmatpush1.xpose.msra.mxu0 0.0
      %258 = vmatprep.subr.mxu0 0.0
      %v259 = vand.u32 %v226, 4294901760
      %260 = vmatpush1.xpose.msra.mxu0 %v259
      %261 = vmatprep.subr.mxu0 0.0
      %262 = vmatpush2.xpose.msra.mxu0 0.0
      %263 = vmatprep.subr.mxu0 0.0
      %264 = vmatpush2.xpose.msra.mxu0 0.0
      %265 = vmatprep.subr.mxu0 0.0
      %266 = vmatpush2.xpose.msra.mxu0 0.0
      %267 = vmatprep.subr.mxu0 0.0
      %268 = vmatpush2.xpose.msra.mxu0 0.0
      %269 = vmatprep.subr.mxu0 0.0
      %270 = vmatpush2.xpose.msra.mxu0 0.0
      %271 = vmatprep.subr.mxu0 0.0
      %272 = vmatpush2.xpose.msra.mxu0 0.0
      %273 = vmatprep.subr.mxu0 0.0
      %274 = vmatpush2.xpose.msra.mxu0 0.0
      %275 = vmatprep.subr.mxu0 0.0
      %276 = vmatpush2.xpose.msra.mxu0 0.0
      %277 = vmatprep.subr.mxu0 0.0
      %278 = vmatpush2.xpose.msra.mxu0 0.0
      %279 = vmatprep.subr.mxu0 0.0
      %280 = vmatpush2.xpose.msra.mxu0 0.0
      %281 = vmatprep.subr.mxu0 0.0
      %282 = vmatpush2.xpose.msra.mxu0 0.0
      %283 = vmatprep.subr.mxu0 0.0
      %284 = vmatpush2.xpose.msra.mxu0 0.0
      %285 = vmatprep.subr.mxu0 0.0
      %286 = vmatpush2.xpose.msra.mxu0 0.0
      %287 = vmatprep.subr.mxu0 0.0
      %288 = vmatpush2.xpose.msra.mxu0 0.0
      %289 = vmatprep.subr.mxu0 0.0
      %290 = vmatpush2.xpose.msra.mxu0 0.0
      %291 = vmatprep.subr.mxu0 0.0
      %292 = vmatpush2.xpose.msra.mxu0 0.0
      %293 = vmatprep.mubr.f32.mxu0 0.0
      %v294 = vand.u32 %v226, 4294901760
      %v295 = vsub.f32 %v226, %v294
      %v296 = vand.u32 %v295, 4294901760
      %v297 = vsub.f32 %v295, %v296
      %v298 = vand.u32 %v297, 4294901760
      %299 = vmatmul.mubr.f32.gmra.mxu0 %v298
      %v300 = vpop.f32.mrf.mxu0
      %v301 = vadd.f32 0.0, %v300
      %v302 = vpop.f32.mrf.mxu0
      %303 = vdwg.mxu0
      %304 = vmatprep.subr.mxu0 0.0
      %305 = vmatpush1.xpose.msra.mxu0 0.0
      %306 = vmatprep.subr.mxu0 0.0
      %307 = vmatpush1.xpose.msra.mxu0 0.0
      %308 = vmatprep.subr.mxu0 0.0
      %309 = vmatpush1.xpose.msra.mxu0 0.0
      %310 = vmatprep.subr.mxu0 0.0
      %311 = vmatpush1.xpose.msra.mxu0 0.0
      %312 = vmatprep.subr.mxu0 0.0
      %313 = vmatpush1.xpose.msra.mxu0 0.0
      %314 = vmatprep.subr.mxu0 0.0
      %315 = vmatpush1.xpose.msra.mxu0 0.0
      %316 = vmatprep.subr.mxu0 0.0
      %317 = vmatpush1.xpose.msra.mxu0 0.0
      %318 = vmatprep.subr.mxu0 0.0
      %319 = vmatpush1.xpose.msra.mxu0 0.0
      %320 = vmatprep.subr.mxu0 0.0
      %321 = vmatpush1.xpose.msra.mxu0 0.0
      %322 = vmatprep.subr.mxu0 0.0
      %323 = vmatpush1.xpose.msra.mxu0 0.0
      %324 = vmatprep.subr.mxu0 0.0
      %325 = vmatpush1.xpose.msra.mxu0 0.0
      %326 = vmatprep.subr.mxu0 0.0
      %327 = vmatpush1.xpose.msra.mxu0 0.0
      %328 = vmatprep.subr.mxu0 0.0
      %329 = vmatpush1.xpose.msra.mxu0 0.0
      %330 = vmatprep.subr.mxu0 0.0
      %331 = vmatpush1.xpose.msra.mxu0 0.0
      %332 = vmatprep.subr.mxu0 0.0
      %333 = vmatpush1.xpose.msra.mxu0 0.0
      %334 = vmatprep.subr.mxu0 0.0
      %v335 = vand.u32 %v226, 4294901760
      %v336 = vsub.f32 %v226, %v335
      %v337 = vand.u32 %v336, 4294901760
      %v338 = vsub.f32 %v336, %v337
      %v339 = vand.u32 %v338, 4294901760
      %340 = vmatpush1.xpose.msra.mxu0 %v339
      %341 = vmatprep.subr.mxu0 0.0
      %342 = vmatpush2.xpose.msra.mxu0 0.0
      %343 = vmatprep.subr.mxu0 0.0
      %344 = vmatpush2.xpose.msra.mxu0 0.0
      %345 = vmatprep.subr.mxu0 0.0
      %346 = vmatpush2.xpose.msra.mxu0 0.0
      %347 = vmatprep.subr.mxu0 0.0
      %348 = vmatpush2.xpose.msra.mxu0 0.0
      %349 = vmatprep.subr.mxu0 0.0
      %350 = vmatpush2.xpose.msra.mxu0 0.0
      %351 = vmatprep.subr.mxu0 0.0
      %352 = vmatpush2.xpose.msra.mxu0 0.0
      %353 = vmatprep.subr.mxu0 0.0
      %354 = vmatpush2.xpose.msra.mxu0 0.0
      %355 = vmatprep.subr.mxu0 0.0
      %356 = vmatpush2.xpose.msra.mxu0 0.0
      %357 = vmatprep.subr.mxu0 0.0
      %358 = vmatpush2.xpose.msra.mxu0 0.0
      %359 = vmatprep.subr.mxu0 0.0
      %360 = vmatpush2.xpose.msra.mxu0 0.0
      %361 = vmatprep.subr.mxu0 0.0
      %362 = vmatpush2.xpose.msra.mxu0 0.0
      %363 = vmatprep.subr.mxu0 0.0
      %364 = vmatpush2.xpose.msra.mxu0 0.0
      %365 = vmatprep.subr.mxu0 0.0
      %366 = vmatpush2.xpose.msra.mxu0 0.0
      %367 = vmatprep.subr.mxu0 0.0
      %368 = vmatpush2.xpose.msra.mxu0 0.0
      %369 = vmatprep.subr.mxu0 0.0
      %370 = vmatpush2.xpose.msra.mxu0 0.0
      %371 = vmatprep.subr.mxu0 0.0
      %372 = vmatpush2.xpose.msra.mxu0 0.0
      %373 = vmatprep.mubr.f32.mxu0 0.0
      %v374 = vand.u32 %v226, 4294901760
      %375 = vmatmul.mubr.f32.gmra.mxu0 %v374
      %v376 = vpop.f32.mrf.mxu0
      %v377 = vadd.f32 %v301, %v376
      %v378 = vpop.f32.mrf.mxu0
      %379 = vdwg.mxu0
      %380 = vmatprep.subr.mxu0 0.0
      %381 = vmatpush1.xpose.msra.mxu0 0.0
      %382 = vmatprep.subr.mxu0 0.0
      %383 = vmatpush1.xpose.msra.mxu0 0.0
      %384 = vmatprep.subr.mxu0 0.0
      %385 = vmatpush1.xpose.msra.mxu0 0.0
      %386 = vmatprep.subr.mxu0 0.0
      %387 = vmatpush1.xpose.msra.mxu0 0.0
      %388 = vmatprep.subr.mxu0 0.0
      %389 = vmatpush1.xpose.msra.mxu0 0.0
      %390 = vmatprep.subr.mxu0 0.0
      %391 = vmatpush1.xpose.msra.mxu0 0.0
      %392 = vmatprep.subr.mxu0 0.0
      %393 = vmatpush1.xpose.msra.mxu0 0.0
      %394 = vmatprep.subr.mxu0 0.0
      %395 = vmatpush1.xpose.msra.mxu0 0.0
      %396 = vmatprep.subr.mxu0 0.0
      %397 = vmatpush1.xpose.msra.mxu0 0.0
      %398 = vmatprep.subr.mxu0 0.0
      %399 = vmatpush1.xpose.msra.mxu0 0.0
      %400 = vmatprep.subr.mxu0 0.0
      %401 = vmatpush1.xpose.msra.mxu0 0.0
      %402 = vmatprep.subr.mxu0 0.0
      %403 = vmatpush1.xpose.msra.mxu0 0.0
      %404 = vmatprep.subr.mxu0 0.0
      %405 = vmatpush1.xpose.msra.mxu0 0.0
      %406 = vmatprep.subr.mxu0 0.0
      %407 = vmatpush1.xpose.msra.mxu0 0.0
      %408 = vmatprep.subr.mxu0 0.0
      %409 = vmatpush1.xpose.msra.mxu0 0.0
      %410 = vmatprep.subr.mxu0 0.0
      %v411 = vand.u32 %v226, 4294901760
      %v412 = vsub.f32 %v226, %v411
      %413 = vmatpush1.xpose.msra.mxu0 %v412
      %414 = vmatprep.subr.mxu0 0.0
      %415 = vmatpush2.xpose.msra.mxu0 0.0
      %416 = vmatprep.subr.mxu0 0.0
      %417 = vmatpush2.xpose.msra.mxu0 0.0
      %418 = vmatprep.subr.mxu0 0.0
      %419 = vmatpush2.xpose.msra.mxu0 0.0
      %420 = vmatprep.subr.mxu0 0.0
      %421 = vmatpush2.xpose.msra.mxu0 0.0
      %422 = vmatprep.subr.mxu0 0.0
      %423 = vmatpush2.xpose.msra.mxu0 0.0
      %424 = vmatprep.subr.mxu0 0.0
      %425 = vmatpush2.xpose.msra.mxu0 0.0
      %426 = vmatprep.subr.mxu0 0.0
      %427 = vmatpush2.xpose.msra.mxu0 0.0
      %428 = vmatprep.subr.mxu0 0.0
      %429 = vmatpush2.xpose.msra.mxu0 0.0
      %430 = vmatprep.subr.mxu0 0.0
      %431 = vmatpush2.xpose.msra.mxu0 0.0
      %432 = vmatprep.subr.mxu0 0.0
      %433 = vmatpush2.xpose.msra.mxu0 0.0
      %434 = vmatprep.subr.mxu0 0.0
      %435 = vmatpush2.xpose.msra.mxu0 0.0
      %436 = vmatprep.subr.mxu0 0.0
      %437 = vmatpush2.xpose.msra.mxu0 0.0
      %438 = vmatprep.subr.mxu0 0.0
      %439 = vmatpush2.xpose.msra.mxu0 0.0
      %440 = vmatprep.subr.mxu0 0.0
      %441 = vmatpush2.xpose.msra.mxu0 0.0
      %442 = vmatprep.subr.mxu0 0.0
      %443 = vmatpush2.xpose.msra.mxu0 0.0
      %444 = vmatprep.subr.mxu0 0.0
      %445 = vmatpush2.xpose.msra.mxu0 0.0
      %446 = vmatprep.mubr.f32.mxu0 0.0
      %v447 = vand.u32 %v226, 4294901760
      %v448 = vsub.f32 %v226, %v447
      %449 = vmatmul.mubr.f32.gmra.mxu0 %v448
      %v450 = vpop.f32.mrf.mxu0
      %v451 = vadd.f32 %v377, %v450
      %v452 = vpop.f32.mrf.mxu0
      %453 = vdwg.mxu0
      %454 = vmatprep.subr.mxu0 0.0
      %455 = vmatpush1.xpose.msra.mxu0 0.0
      %456 = vmatprep.subr.mxu0 0.0
      %457 = vmatpush1.xpose.msra.mxu0 0.0
      %458 = vmatprep.subr.mxu0 0.0
      %459 = vmatpush1.xpose.msra.mxu0 0.0
      %460 = vmatprep.subr.mxu0 0.0
      %461 = vmatpush1.xpose.msra.mxu0 0.0
      %462 = vmatprep.subr.mxu0 0.0
      %463 = vmatpush1.xpose.msra.mxu0 0.0
      %464 = vmatprep.subr.mxu0 0.0
      %465 = vmatpush1.xpose.msra.mxu0 0.0
      %466 = vmatprep.subr.mxu0 0.0
      %467 = vmatpush1.xpose.msra.mxu0 0.0
      %468 = vmatprep.subr.mxu0 0.0
      %469 = vmatpush1.xpose.msra.mxu0 0.0
      %470 = vmatprep.subr.mxu0 0.0
      %471 = vmatpush1.xpose.msra.mxu0 0.0
      %472 = vmatprep.subr.mxu0 0.0
      %473 = vmatpush1.xpose.msra.mxu0 0.0
      %474 = vmatprep.subr.mxu0 0.0
      %475 = vmatpush1.xpose.msra.mxu0 0.0
      %476 = vmatprep.subr.mxu0 0.0
      %477 = vmatpush1.xpose.msra.mxu0 0.0
      %478 = vmatprep.subr.mxu0 0.0
      %479 = vmatpush1.xpose.msra.mxu0 0.0
      %480 = vmatprep.subr.mxu0 0.0
      %481 = vmatpush1.xpose.msra.mxu0 0.0
      %482 = vmatprep.subr.mxu0 0.0
      %483 = vmatpush1.xpose.msra.mxu0 0.0
      %484 = vmatprep.subr.mxu0 0.0
      %v485 = vand.u32 %v226, 4294901760
      %486 = vmatpush1.xpose.msra.mxu0 %v485
      %487 = vmatprep.subr.mxu0 0.0
      %488 = vmatpush2.xpose.msra.mxu0 0.0
      %489 = vmatprep.subr.mxu0 0.0
      %490 = vmatpush2.xpose.msra.mxu0 0.0
      %491 = vmatprep.subr.mxu0 0.0
      %492 = vmatpush2.xpose.msra.mxu0 0.0
      %493 = vmatprep.subr.mxu0 0.0
      %494 = vmatpush2.xpose.msra.mxu0 0.0
      %495 = vmatprep.subr.mxu0 0.0
      %496 = vmatpush2.xpose.msra.mxu0 0.0
      %497 = vmatprep.subr.mxu0 0.0
      %498 = vmatpush2.xpose.msra.mxu0 0.0
      %499 = vmatprep.subr.mxu0 0.0
      %500 = vmatpush2.xpose.msra.mxu0 0.0
      %501 = vmatprep.subr.mxu0 0.0
      %502 = vmatpush2.xpose.msra.mxu0 0.0
      %503 = vmatprep.subr.mxu0 0.0
      %504 = vmatpush2.xpose.msra.mxu0 0.0
      %505 = vmatprep.subr.mxu0 0.0
      %506 = vmatpush2.xpose.msra.mxu0 0.0
      %507 = vmatprep.subr.mxu0 0.0
      %508 = vmatpush2.xpose.msra.mxu0 0.0
      %509 = vmatprep.subr.mxu0 0.0
      %510 = vmatpush2.xpose.msra.mxu0 0.0
      %511 = vmatprep.subr.mxu0 0.0
      %512 = vmatpush2.xpose.msra.mxu0 0.0
      %513 = vmatprep.subr.mxu0 0.0
      %514 = vmatpush2.xpose.msra.mxu0 0.0
      %515 = vmatprep.subr.mxu0 0.0
      %516 = vmatpush2.xpose.msra.mxu0 0.0
      %517 = vmatprep.subr.mxu0 0.0
      %518 = vmatpush2.xpose.msra.mxu0 0.0
      %519 = vmatprep.mubr.f32.mxu0 0.0
      %v520 = vand.u32 %v226, 4294901760
      %v521 = vsub.f32 %v226, %v520
      %v522 = vand.u32 %v521, 4294901760
      %523 = vmatmul.mubr.f32.gmra.mxu0 %v522
      %v524 = vpop.f32.mrf.mxu0
      %v525 = vadd.f32 %v451, %v524
      %v526 = vpop.f32.mrf.mxu0
      %527 = vdwg.mxu0
      %528 = vmatprep.subr.mxu0 0.0
      %529 = vmatpush1.xpose.msra.mxu0 0.0
      %530 = vmatprep.subr.mxu0 0.0
      %531 = vmatpush1.xpose.msra.mxu0 0.0
      %532 = vmatprep.subr.mxu0 0.0
      %533 = vmatpush1.xpose.msra.mxu0 0.0
      %534 = vmatprep.subr.mxu0 0.0
      %535 = vmatpush1.xpose.msra.mxu0 0.0
      %536 = vmatprep.subr.mxu0 0.0
      %537 = vmatpush1.xpose.msra.mxu0 0.0
      %538 = vmatprep.subr.mxu0 0.0
      %539 = vmatpush1.xpose.msra.mxu0 0.0
      %540 = vmatprep.subr.mxu0 0.0
      %541 = vmatpush1.xpose.msra.mxu0 0.0
      %542 = vmatprep.subr.mxu0 0.0
      %543 = vmatpush1.xpose.msra.mxu0 0.0
      %544 = vmatprep.subr.mxu0 0.0
      %545 = vmatpush1.xpose.msra.mxu0 0.0
      %546 = vmatprep.subr.mxu0 0.0
      %547 = vmatpush1.xpose.msra.mxu0 0.0
      %548 = vmatprep.subr.mxu0 0.0
      %549 = vmatpush1.xpose.msra.mxu0 0.0
      %550 = vmatprep.subr.mxu0 0.0
      %551 = vmatpush1.xpose.msra.mxu0 0.0
      %552 = vmatprep.subr.mxu0 0.0
      %553 = vmatpush1.xpose.msra.mxu0 0.0
      %554 = vmatprep.subr.mxu0 0.0
      %555 = vmatpush1.xpose.msra.mxu0 0.0
      %556 = vmatprep.subr.mxu0 0.0
      %557 = vmatpush1.xpose.msra.mxu0 0.0
      %558 = vmatprep.subr.mxu0 0.0
      %v559 = vand.u32 %v226, 4294901760
      %v560 = vsub.f32 %v226, %v559
      %v561 = vand.u32 %v560, 4294901760
      %562 = vmatpush1.xpose.msra.mxu0 %v561
      %563 = vmatprep.subr.mxu0 0.0
      %564 = vmatpush2.xpose.msra.mxu0 0.0
      %565 = vmatprep.subr.mxu0 0.0
      %566 = vmatpush2.xpose.msra.mxu0 0.0
      %567 = vmatprep.subr.mxu0 0.0
      %568 = vmatpush2.xpose.msra.mxu0 0.0
      %569 = vmatprep.subr.mxu0 0.0
      %570 = vmatpush2.xpose.msra.mxu0 0.0
      %571 = vmatprep.subr.mxu0 0.0
      %572 = vmatpush2.xpose.msra.mxu0 0.0
      %573 = vmatprep.subr.mxu0 0.0
      %574 = vmatpush2.xpose.msra.mxu0 0.0
      %575 = vmatprep.subr.mxu0 0.0
      %576 = vmatpush2.xpose.msra.mxu0 0.0
      %577 = vmatprep.subr.mxu0 0.0
      %578 = vmatpush2.xpose.msra.mxu0 0.0
      %579 = vmatprep.subr.mxu0 0.0
      %580 = vmatpush2.xpose.msra.mxu0 0.0
      %581 = vmatprep.subr.mxu0 0.0
      %582 = vmatpush2.xpose.msra.mxu0 0.0
      %583 = vmatprep.subr.mxu0 0.0
      %584 = vmatpush2.xpose.msra.mxu0 0.0
      %585 = vmatprep.subr.mxu0 0.0
      %586 = vmatpush2.xpose.msra.mxu0 0.0
      %587 = vmatprep.subr.mxu0 0.0
      %588 = vmatpush2.xpose.msra.mxu0 0.0
      %589 = vmatprep.subr.mxu0 0.0
      %590 = vmatpush2.xpose.msra.mxu0 0.0
      %591 = vmatprep.subr.mxu0 0.0
      %592 = vmatpush2.xpose.msra.mxu0 0.0
      %593 = vmatprep.subr.mxu0 0.0
      %594 = vmatpush2.xpose.msra.mxu0 0.0
      %595 = vmatprep.mubr.f32.mxu0 0.0
      %v596 = vand.u32 %v226, 4294901760
      %597 = vmatmul.mubr.f32.gmra.mxu0 %v596
      %v598 = vpop.f32.mrf.mxu0
      %v599 = vadd.f32 %v525, %v598
      %v600 = vpop.f32.mrf.mxu0
      %601 = vdwg.mxu0
      %602 = vmatprep.subr.mxu0 0.0
      %603 = vmatpush1.xpose.msra.mxu0 0.0
      %604 = vmatprep.subr.mxu0 0.0
      %605 = vmatpush1.xpose.msra.mxu0 0.0
      %606 = vmatprep.subr.mxu0 0.0
      %607 = vmatpush1.xpose.msra.mxu0 0.0
      %608 = vmatprep.subr.mxu0 0.0
      %609 = vmatpush1.xpose.msra.mxu0 0.0
      %610 = vmatprep.subr.mxu0 0.0
      %611 = vmatpush1.xpose.msra.mxu0 0.0
      %612 = vmatprep.subr.mxu0 0.0
      %613 = vmatpush1.xpose.msra.mxu0 0.0
      %614 = vmatprep.subr.mxu0 0.0
      %615 = vmatpush1.xpose.msra.mxu0 0.0
      %616 = vmatprep.subr.mxu0 0.0
      %617 = vmatpush1.xpose.msra.mxu0 0.0
      %618 = vmatprep.subr.mxu0 0.0
      %619 = vmatpush1.xpose.msra.mxu0 0.0
      %620 = vmatprep.subr.mxu0 0.0
      %621 = vmatpush1.xpose.msra.mxu0 0.0
      %622 = vmatprep.subr.mxu0 0.0
      %623 = vmatpush1.xpose.msra.mxu0 0.0
      %624 = vmatprep.subr.mxu0 0.0
      %625 = vmatpush1.xpose.msra.mxu0 0.0
      %626 = vmatprep.subr.mxu0 0.0
      %627 = vmatpush1.xpose.msra.mxu0 0.0
      %628 = vmatprep.subr.mxu0 0.0
      %629 = vmatpush1.xpose.msra.mxu0 0.0
      %630 = vmatprep.subr.mxu0 0.0
      %631 = vmatpush1.xpose.msra.mxu0 0.0
      %632 = vmatprep.subr.mxu0 0.0
      %v633 = vand.u32 %v226, 4294901760
      %634 = vmatpush1.xpose.msra.mxu0 %v633
      %635 = vmatprep.subr.mxu0 0.0
      %636 = vmatpush2.xpose.msra.mxu0 0.0
      %637 = vmatprep.subr.mxu0 0.0
      %638 = vmatpush2.xpose.msra.mxu0 0.0
      %639 = vmatprep.subr.mxu0 0.0
      %640 = vmatpush2.xpose.msra.mxu0 0.0
      %641 = vmatprep.subr.mxu0 0.0
      %642 = vmatpush2.xpose.msra.mxu0 0.0
      %643 = vmatprep.subr.mxu0 0.0
      %644 = vmatpush2.xpose.msra.mxu0 0.0
      %645 = vmatprep.subr.mxu0 0.0
      %646 = vmatpush2.xpose.msra.mxu0 0.0
      %647 = vmatprep.subr.mxu0 0.0
      %648 = vmatpush2.xpose.msra.mxu0 0.0
      %649 = vmatprep.subr.mxu0 0.0
      %650 = vmatpush2.xpose.msra.mxu0 0.0
      %651 = vmatprep.subr.mxu0 0.0
      %652 = vmatpush2.xpose.msra.mxu0 0.0
      %653 = vmatprep.subr.mxu0 0.0
      %654 = vmatpush2.xpose.msra.mxu0 0.0
      %655 = vmatprep.subr.mxu0 0.0
      %656 = vmatpush2.xpose.msra.mxu0 0.0
      %657 = vmatprep.subr.mxu0 0.0
      %658 = vmatpush2.xpose.msra.mxu0 0.0
      %659 = vmatprep.subr.mxu0 0.0
      %660 = vmatpush2.xpose.msra.mxu0 0.0
      %661 = vmatprep.subr.mxu0 0.0
      %662 = vmatpush2.xpose.msra.mxu0 0.0
      %663 = vmatprep.subr.mxu0 0.0
      %664 = vmatpush2.xpose.msra.mxu0 0.0
      %665 = vmatprep.subr.mxu0 0.0
      %666 = vmatpush2.xpose.msra.mxu0 0.0
      %667 = vmatprep.mubr.f32.mxu0 0.0
      %v668 = vand.u32 %v226, 4294901760
      %669 = vmatmul.mubr.f32.gmra.mxu0 %v668
      %v670 = vpop.f32.mrf.mxu0
      %v671 = vadd.f32 %v599, %v670
      %v672 = vpop.f32.mrf.mxu0
      %673 = vdwg.mxu0
      %v675 = vlaneseq
      %v676 = vshrl.u32 %v675, 7
      %v677 = vsub.s32 0, %v676
      %v678 = vrot.slane %v223, %v677
      %v680 = vmul.f32 %v222, %v678
      %vm681 = vcmask 125952
      %v682 = vsel %vm681, %v680, 0.0
      %683 = vadd.xlane.f32.xlu0 %v682
      %v684 = vpop.xlane.xlu0 %683
      %v685 = vmul.f32 %v223, %v223
      %vm686 = vcmask 122880
      %v687 = vsel %vm686, %v685, 0.0
      %688 = vadd.xlane.f32.xlu0 %v687
      %v689 = vpop.xlane.xlu0 %688
      %v690 = vsel %vm681, %v222, 0.0
      %691 = vadd.xlane.f32.xlu0 %v690
      %v692 = vpop.xlane.xlu0 %691
      %v693 = vsel %vm686, %v223, 0.0
      %694 = vadd.xlane.f32.xlu0 %v693
      %v695 = vpop.xlane.xlu0 %694
      %v696 = vld [vmem:[#allocation2] sm:$0xf]
      %v697 = vadd.f32 %v696, %v671
      %vm698 = vcmask 27648
      %699 = vst.msk [vmem:[#allocation2] sm:$0xf] %vm698, %v697
      %v700 = vld [vmem:[#allocation2] sm:$0xf]
      %v701 = vadd.f32 %v700, %v684
      %vm702 = vcmask 35872
      %703 = vst.msk [vmem:[#allocation2] sm:$0xf] %vm702, %v701
      %v704 = vld [vmem:[#allocation2 + $0x4] sm:$0x1]
      %v705 = vadd.f32 %v704, %v689
      %vm706 = vcmask 32800
      %707 = vst.msk [vmem:[#allocation2 + $0x4] sm:$0x1] %vm706, %v705
      %v708 = vld [vmem:[#allocation2] sm:$0xf]
      %v709 = vadd.f32 %v708, %v692
      %vm710 = vcmask 44072
      %711 = vst.msk [vmem:[#allocation2] sm:$0xf] %vm710, %v709
      %v712 = vld [vmem:[#allocation2 + $0x4] sm:$0x1]
      %v713 = vadd.f32 %v712, %v695
      %vm714 = vcmask 41000
      %715 = vst.msk [vmem:[#allocation2 + $0x4] sm:$0x1] %vm714, %v713
      %v716 = vld [vmem:[#allocation2 + $0x5] sm:$0x1]
      %v717 = vadd.f32 %v716, 16.0
      %718 = vst.msk [vmem:[#allocation2 + $0x5] sm:$0x1] %vm714, %v717
      // Predicated region
      $region33: #{qnr_loss.3} parent=27 // pred_check
        %p719 = pneg %p216
      $region34: #{qnr_loss.3} parent=27 // pred_check_branch
        %721 = sbr.rel (%p719) target = $region36
      $region35: #{qnr_loss.3} parent=27 // pred_region
        %v722 = vld [vmem:[#allocation2] sm:$0xff]
        %vm723 = vcmask 64512
        %724 = vst.msk [vmem:[%s215] sm:$0xff] %vm723, %v722
      $region36: #{qnr_loss.3} parent=27 // pred_fallthru
        _
      %p725 = scmp.lt.s32.totalorder %s18, 1
      %s726 = scalar_select %p725, %s18, 1
      %p727 = scmp.lt.s32.totalorder %s19, 0
      %s728 = scalar_select %p727, %s19, 0
      %s729 = sadd.s32 %s728, %s726
      %s730 = smul.addr %s729, 8
      %s731 = scalar_lea.vmem %s2, %s730
      // Predicated region
      $region37: #{qnr_loss.3} parent=27 // pred_check
        %p732 = pneg %p112
      $region38: #{qnr_loss.3} parent=27 // pred_check_branch
        %734 = sbr.rel (%p732) target = $region40
      $region39: #{qnr_loss.3} parent=27 // pred_region
        _
      $region40: #{qnr_loss.3} parent=27 // pred_fallthru
        _
    $region28: #{qnr_loss.3} parent=5 // pred_fallthru
      _
    %p735 = scmp.le.s32.totalorder 2, %s8
    // Predicated region
    $region41: #{qnr_loss.3} parent=5 // pred_check
      %p736 = pneg %p735
    $region42: #{qnr_loss.3} parent=5 // pred_check_branch
      %738 = sbr.rel (%p736) target = $region44
    $region43: #{qnr_loss.3} parent=5 // pred_region
      %s739 = ssub.s32 %s8, 2
      // Predicated region
      $region45: #{qnr_loss.3} parent=43 // pred_check
        %p740 = pneg %p118
      $region46: #{qnr_loss.3} parent=43 // pred_check_branch
        %742 = sbr.rel (%p740) target = $region48
      $region47: #{qnr_loss.3} parent=43 // pred_region
        %p743 = scmp.lt.s32.totalorder %s21, 1
        %s744 = scalar_select %p743, %s21, 1
        %p745 = scmp.lt.s32.totalorder %s22, 0
        %s746 = scalar_select %p745, %s22, 0
        %s747 = sadd.s32 %s746, %s744
        %s748 = smul.addr %s747, 8
        %s749 = scalar_lea.vmem %s2, %s748
      $region48: #{qnr_loss.3} parent=43 // pred_fallthru
        _
    $region44: #{qnr_loss.3} parent=5 // pred_fallthru
      _
  $region6: #{qnr_loss.3} parent=0 // loop_footer
    %s12 = sadd.s32 1, %s8
  $region7: #{qnr_loss.3} parent=0 // loop_footer_branch
    %7 = sbr.rel target = $region3
  $region8: #{qnr_loss.3} parent=0 // loop_exit
    _

// kernel: qnr_loss.2
$region0: #{qnr_loss.2}
  #allocation0 [shape = 'u32[]', space=smem, size = 0x4, offset = 0x4, fixed_abs, tag = 'smem constant byte address 0x4 - core index']
  #allocation1 [shape = 'u32[144,128]{1,0:T(1,128)}', space=vmem, size = 0x12000, scoped, tag = 'internal scratch']
  #allocation2 [shape = 'f32[8,8]{1,0:T(8,128)}', space=vmem, size = 0x1000, scoped, tag = 'scratch operand']
  %s0 = inlined_call_operand.vmem [shape: f32[2,4,256], index: 0, kind: input, shape index: {}]
  %s1 = inlined_call_operand.vmem [shape: f32[2,1,256], index: 1, kind: input, shape index: {}]
  %s2 = inlined_call_operand.vmem [shape: f32[2,1,8,8], index: 2, kind: output, shape index: {}]
  %s3 = sld [smem:[#allocation0]]
  $region49: #{qnr_loss.2} parent=0
    _
  %s5 = ssub.s32 1, %s3
  %s6 = scalar_select 0, %s5, %s3
  loop: start=0, step=1, limit=4
  $region2: #{qnr_loss.2} parent=0 // loop_pre_header
    _
  $region3: #{qnr_loss.2} parent=0 // loop_header
    %s8 = sphi 0, %s12
    %p9 = scmp.ge.s32.totalorder %s8, 4
    %s15 = sphi 0, %s34
    %s16 = sphi 0, %s30
    %s17 = sphi 0, %s26
    %s18 = sphi 0, %s15
    %s19 = sphi 0, %s16
    %s20 = sphi 0, %s17
    %s21 = sphi 0, %s18
    %s22 = sphi 0, %s19
    %s23 = sphi 0, %s20
    %s41 = sphi 0, %s43
    %s44 = sphi 0, %s41
    %s45 = sphi 0, %s44
    %s61 = sphi 0, %s45
    %s71 = sphi 0, %s73
    %s74 = sphi 0, %s71
    %s75 = sphi 0, %s74
    %s91 = sphi 0, %s75
    %s99 = sphi 0, %s101
    %s102 = sphi 0, %s99
    %s103 = sphi 0, %s102
    %s119 = sphi 0, %s103
  $region4: #{qnr_loss.2} parent=0 // loop_header_branch
    %11 = sbr.rel (%p9) target = $region8
  $region5: #{qnr_loss.2} parent=0 // loop_body
    %s13 = ssub.s32 %s8, 1
    %s14 = ssub.s32 %s8, 2
    %s24 = sadd.s32 1, %s17
    %p25 = scmp.ge.s32.totalorder %s24, 1
    %s26 = scalar_select %p25, 0, %s24
    %s27 = sadd.s32 1, %s16
    %s28 = scalar_select %p25, %s27, %s16
    %p29 = scmp.ge.s32.totalorder %s28, 1
    %s30 = scalar_select %p29, 0, %s28
    %s31 = sadd.s32 1, %s15
    %s32 = scalar_select %p29, %s31, %s15
    %p33 = scmp.ge.s32.totalorder %s32, 2
    %s34 = scalar_select %p33, 0, %s32
    %s35 = sadd.s32 %s16, %s17
    %s36 = sadd.s32 %s30, %s26
    %s37 = ssub.s32 %s15, %s34
    %s38 = ssub.s32 %s35, %s36
    %s39 = sor.u32 %s37, %s38
    %p40 = scmp.eq.s32.totalorder %s39, 0
    %s42 = sadd.s32 %s41, 1
    %s43 = scalar_select %p40, %s41, %s42
    %p46 = pneg %p40
    %p47 = scmp.eq.s32.totalorder %s8, 1
    %p48 = por %p46, %p47
    %p49 = scmp.ne.s32.totalorder %s41, %s44
    %p50 = scmp.eq.s32.totalorder %s8, 0
    %p51 = por %p49, %p50
    %p52 = scmp.ne.s32.totalorder %s41, %s44
    %p53 = scmp.eq.s32.totalorder %s13, 1
    %p54 = por %p52, %p53
    %p55 = scmp.ne.s32.totalorder %s44, %s45
    %p56 = scmp.eq.s32.totalorder %s13, 0
    %p57 = por %p55, %p56
    %p58 = scmp.ne.s32.totalorder %s44, %s45
    %p59 = scmp.eq.s32.totalorder %s14, 1
    %p60 = por %p58, %p59
    %p62 = scmp.ne.s32.totalorder %s45, %s61
    %p63 = scmp.eq.s32.totalorder %s14, 0
    %p64 = por %p62, %p63
    %s65 = sadd.s32 %s16, %s17
    %s66 = sadd.s32 %s30, %s26
    %s67 = ssub.s32 %s15, %s34
    %s68 = ssub.s32 %s65, %s66
    %s69 = sor.u32 %s67, %s68
    %p70 = scmp.eq.s32.totalorder %s69, 0
    %s72 = sadd.s32 %s71, 1
    %s73 = scalar_select %p70, %s71, %s72
    %p76 = pneg %p70
    %p77 = scmp.eq.s32.totalorder %s8, 1
    %p78 = por %p76, %p77
    %p79 = scmp.ne.s32.totalorder %s71, %s74
    %p80 = scmp.eq.s32.totalorder %s8, 0
    %p81 = por %p79, %p80
    %p82 = scmp.ne.s32.totalorder %s71, %s74
    %p83 = scmp.eq.s32.totalorder %s13, 1
    %p84 = por %p82, %p83
    %p85 = scmp.ne.s32.totalorder %s74, %s75
    %p86 = scmp.eq.s32.totalorder %s13, 0
    %p87 = por %p85, %p86
    %p88 = scmp.ne.s32.totalorder %s74, %s75
    %p89 = scmp.eq.s32.totalorder %s14, 1
    %p90 = por %p88, %p89
    %p92 = scmp.ne.s32.totalorder %s75, %s91
    %p93 = scmp.eq.s32.totalorder %s14, 0
    %p94 = por %p92, %p93
    %s95 = ssub.s32 %s15, %s34
    %s96 = ssub.s32 %s16, %s30
    %s97 = sor.u32 %s95, %s96
    %p98 = scmp.eq.s32.totalorder %s97, 0
    %s100 = sadd.s32 %s99, 1
    %s101 = scalar_select %p98, %s99, %s100
    %p104 = pneg %p98
    %p105 = scmp.eq.s32.totalorder %s8, 1
    %p106 = por %p104, %p105
    %p107 = scmp.ne.s32.totalorder %s99, %s102
    %p108 = scmp.eq.s32.totalorder %s8, 0
    %p109 = por %p107, %p108
    %p110 = scmp.ne.s32.totalorder %s99, %s102
    %p111 = scmp.eq.s32.totalorder %s13, 1
    %p112 = por %p110, %p111
    %p113 = scmp.ne.s32.totalorder %s102, %s103
    %p114 = scmp.eq.s32.totalorder %s13, 0
    %p115 = por %p113, %p114
    %p116 = scmp.ne.s32.totalorder %s102, %s103
    %p117 = scmp.eq.s32.totalorder %s14, 1
    %p118 = por %p116, %p117
    %p120 = scmp.ne.s32.totalorder %s103, %s119
    %p121 = scmp.eq.s32.totalorder %s14, 0
    %p122 = por %p120, %p121
    %p123 = scmp.le.s32.totalorder 1, %s8
    %p124 = scmp.lt.s32.totalorder %s8, 3
    %p125 = pnand %p123, %p124
    %p126 = pneg %p125
    // Predicated region
    $region9: #{qnr_loss.2} parent=5 // pred_check
      _
    $region10: #{qnr_loss.2} parent=5 // pred_check_branch
      %128 = sbr.rel (%p125) target = $region12
    $region11: #{qnr_loss.2} parent=5 // pred_region
      %s129 = ssub.s32 %s8, 1
    $region12: #{qnr_loss.2} parent=5 // pred_fallthru
      _
    %p130 = scmp.lt.s32.totalorder %s8, 2
    // Predicated region
    $region13: #{qnr_loss.2} parent=5 // pred_check
      %p131 = pneg %p130
    $region14: #{qnr_loss.2} parent=5 // pred_check_branch
      %133 = sbr.rel (%p131) target = $region16
    $region15: #{qnr_loss.2} parent=5 // pred_region
      // Predicated region
      $region17: #{qnr_loss.2} parent=15 // pred_check
        %p134 = pneg %p51
      $region18: #{qnr_loss.2} parent=15 // pred_check_branch
        %136 = sbr.rel (%p134) target = $region20
      $region19: #{qnr_loss.2} parent=15 // pred_region
        %s137 = sadd.s32 %s16, %s17
        %s138 = smul.u32 2, %s137
        %p139 = scmp.lt.s32.totalorder %s15, 1
        %s140 = scalar_select %p139, %s15, 1
        %p141 = scmp.lt.s32.totalorder %s138, 1
        %s142 = scalar_select %p141, %s138, 1
        %s143 = smul.addr %s140, 2
        %s144 = sadd.s32 %s142, %s143
        %s145 = smul.addr %s144, 4
        %s146 = scalar_lea.vmem %s0, %s145
        %s147 = sadd.s32 %s16, %s17
        %s148 = smul.u32 2, %s147
      $region20: #{qnr_loss.2} parent=15 // pred_fallthru
        _
      // Predicated region
      $region21: #{qnr_loss.2} parent=15 // pred_check
        %p149 = pneg %p81
      $region22: #{qnr_loss.2} parent=15 // pred_check_branch
        %151 = sbr.rel (%p149) target = $region24
      $region23: #{qnr_loss.2} parent=15 // pred_region
        %s152 = sadd.s32 %s16, %s17
        %s153 = smul.u32 2, %s152
        %p154 = scmp.lt.s32.totalorder %s15, 1
        %s155 = scalar_select %p154, %s15, 1
        %p156 = scmp.lt.s32.totalorder %s153, 1
        %s157 = scalar_select %p156, %s153, 1
        %s158 = smul.addr %s155, 2
        %s159 = sadd.s32 %s157, %s158
        %s160 = scalar_lea.vmem %s1, %s159
        %s161 = sadd.s32 %s16, %s17
        %s162 = smul.u32 2, %s161
      $region24: #{qnr_loss.2} parent=15 // pred_fallthru
        _
    $region16: #{qnr_loss.2} parent=5 // pred_fallthru
      _
    %p163 = scmp.le.s32.totalorder 1, %s8
    %p164 = scmp.lt.s32.totalorder %s8, 3
    %p165 = pnand %p163, %p164
    %p166 = pneg %p165
    // Predicated region
    $region25: #{qnr_loss.2} parent=5 // pred_check
      _
    $region26: #{qnr_loss.2} parent=5 // pred_check_branch
      %168 = sbr.rel (%p165) target = $region28
    $region27: #{qnr_loss.2} parent=5 // pred_region
      %s169 = ssub.s32 %s8, 1
      %s170 = sadd.s32 %s19, %s20
      %s171 = smul.u32 2, %s170
      %p172 = scmp.lt.s32.totalorder %s18, 1
      %s173 = scalar_select %p172, %s18, 1
      %p174 = scmp.lt.s32.totalorder %s171, 1
      %s175 = scalar_select %p174, %s171, 1
      %s176 = smul.addr %s173, 2
      %s177 = sadd.s32 %s175, %s176
      %s178 = smul.addr %s177, 4
      %s179 = scalar_lea.vmem %s0, %s178
      %p180 = pneg %p57
      %p181 = pneg %p54
      %s182 = sadd.s32 %s19, %s20
      %s183 = smul.u32 2, %s182
      %p184 = scmp.lt.s32.totalorder %s18, 1
      %s185 = scalar_select %p184, %s18, 1
      %p186 = scmp.lt.s32.totalorder %s183, 1
      %s187 = scalar_select %p186, %s183, 1
      %s188 = smul.addr %s185, 2
      %s189 = sadd.s32 %s187, %s188
      %s190 = scalar_lea.vmem %s1, %s189
      %p191 = pneg %p87
      %p192 = pneg %p84
      %p193 = pneg %p115
      %p194 = pneg %p112
      %p195 = scmp.lt.s32.totalorder %s18, 1
      %s196 = scalar_select %p195, %s18, 1
      %p197 = scmp.lt.s32.totalorder %s19, 0
      %s198 = scalar_select %p197, %s19, 0
      %s199 = sadd.s32 %s198, %s196
      %s200 = smul.addr %s199, 8
      %s201 = scalar_lea.vmem %s2, %s200
      %s202 = sadd.s32 %s19, %s20
      %s203 = smul.u32 2, %s202
      %p204 = scmp.lt.s32.totalorder %s18, 1
      %s205 = scalar_select %p204, %s18, 1
      %p206 = scmp.lt.s32.totalorder %s203, 1
      %s207 = scalar_select %p206, %s203, 1
      %s208 = smul.addr %s205, 2
      %s209 = sadd.s32 %s207, %s208
      %s210 = smul.addr %s209, 4
      %s211 = scalar_lea.vmem %s0, %s210
      %s212 = sadd.s32 %s19, %s20
      %s213 = smul.u32 2, %s212
      %s214 = sadd.s32 %s19, %s20
      %s215 = smul.u32 2, %s214
      %p216 = scmp.lt.s32.totalorder %s18, 1
      %s217 = scalar_select %p216, %s18, 1
      %p218 = scmp.lt.s32.totalorder %s215, 1
      %s219 = scalar_select %p218, %s215, 1
      %s220 = smul.addr %s217, 2
      %s221 = sadd.s32 %s219, %s220
      %s222 = scalar_lea.vmem %s1, %s221
      %s223 = sadd.s32 %s19, %s20
      %s224 = smul.u32 2, %s223
      %p225 = scmp.lt.s32.totalorder %s18, 1
      %s226 = scalar_select %p225, %s18, 1
      %p227 = scmp.lt.s32.totalorder %s19, 0
      %s228 = scalar_select %p227, %s19, 0
      %s229 = sadd.s32 %s228, %s226
      %s230 = smul.addr %s229, 8
      %s231 = scalar_lea.vmem %s2, %s230
      %p232 = scmp.eq.s32.totalorder %s20, 0
      // Predicated region
      $region29: #{qnr_loss.2} parent=27 // pred_check
        %p233 = pneg %p232
      $region30: #{qnr_loss.2} parent=27 // pred_check_branch
        %235 = sbr.rel (%p233) target = $region32
      $region31: #{qnr_loss.2} parent=27 // pred_region
        %vm236 = vcmask 64512
        %237 = vst.msk [vmem:[#allocation2] sm:$0xff] %vm236, 0.0
      $region32: #{qnr_loss.2} parent=27 // pred_fallthru
        _
      %v238 = vld [vmem:[%s211] sm:$0xff]
      %v239 = vld [vmem:[%s222] sm:$0x3]
      %v241 = vcombine.high %v238, %v238
      %243 = vmatprep.subr.mxu0 0.0
      %244 = vmatpush1.xpose.msra.mxu0 0.0
      %245 = vmatprep.subr.mxu0 0.0
      %246 = vmatpush1.xpose.msra.mxu0 0.0
      %247 = vmatprep.subr.mxu0 0.0
      %248 = vmatpush1.xpose.msra.mxu0 0.0
      %249 = vmatprep.subr.mxu0 0.0
      %250 = vmatpush1.xpose.msra.mxu0 0.0
      %251 = vmatprep.subr.mxu0 0.0
      %252 = vmatpush1.xpose.msra.mxu0 0.0
      %253 = vmatprep.subr.mxu0 0.0
      %254 = vmatpush1.xpose.msra.mxu0 0.0
      %255 = vmatprep.subr.mxu0 0.0
      %256 = vmatpush1.xpose.msra.mxu0 0.0
      %257 = vmatprep.subr.mxu0 0.0
      %258 = vmatpush1.xpose.msra.mxu0 0.0
      %259 = vmatprep.subr.mxu0 0.0
      %260 = vmatpush1.xpose.msra.mxu0 0.0
      %261 = vmatprep.subr.mxu0 0.0
      %262 = vmatpush1.xpose.msra.mxu0 0.0
      %263 = vmatprep.subr.mxu0 0.0
      %264 = vmatpush1.xpose.msra.mxu0 0.0
      %265 = vmatprep.subr.mxu0 0.0
      %266 = vmatpush1.xpose.msra.mxu0 0.0
      %267 = vmatprep.subr.mxu0 0.0
      %268 = vmatpush1.xpose.msra.mxu0 0.0
      %269 = vmatprep.subr.mxu0 0.0
      %270 = vmatpush1.xpose.msra.mxu0 0.0
      %271 = vmatprep.subr.mxu0 0.0
      %272 = vmatpush1.xpose.msra.mxu0 0.0
      %v273 = vand.u32 %v241, 4294901760
      %274 = vmatprep.subr.mxu0 %v273
      %v275 = vand.u32 %v238, 4294901760
      %276 = vmatpush1.xpose.msra.mxu0 %v275
      %277 = vmatprep.subr.mxu0 0.0
      %278 = vmatpush2.xpose.msra.mxu0 0.0
      %279 = vmatprep.subr.mxu0 0.0
      %280 = vmatpush2.xpose.msra.mxu0 0.0
      %281 = vmatprep.subr.mxu0 0.0
      %282 = vmatpush2.xpose.msra.mxu0 0.0
      %283 = vmatprep.subr.mxu0 0.0
      %284 = vmatpush2.xpose.msra.mxu0 0.0
      %285 = vmatprep.subr.mxu0 0.0
      %286 = vmatpush2.xpose.msra.mxu0 0.0
      %287 = vmatprep.subr.mxu0 0.0
      %288 = vmatpush2.xpose.msra.mxu0 0.0
      %289 = vmatprep.subr.mxu0 0.0
      %290 = vmatpush2.xpose.msra.mxu0 0.0
      %291 = vmatprep.subr.mxu0 0.0
      %292 = vmatpush2.xpose.msra.mxu0 0.0
      %293 = vmatprep.subr.mxu0 0.0
      %294 = vmatpush2.xpose.msra.mxu0 0.0
      %295 = vmatprep.subr.mxu0 0.0
      %296 = vmatpush2.xpose.msra.mxu0 0.0
      %297 = vmatprep.subr.mxu0 0.0
      %298 = vmatpush2.xpose.msra.mxu0 0.0
      %299 = vmatprep.subr.mxu0 0.0
      %300 = vmatpush2.xpose.msra.mxu0 0.0
      %301 = vmatprep.subr.mxu0 0.0
      %302 = vmatpush2.xpose.msra.mxu0 0.0
      %303 = vmatprep.subr.mxu0 0.0
      %304 = vmatpush2.xpose.msra.mxu0 0.0
      %305 = vmatprep.subr.mxu0 0.0
      %306 = vmatpush2.xpose.msra.mxu0 0.0
      %307 = vmatprep.subr.mxu0 0.0
      %308 = vmatpush2.xpose.msra.mxu0 0.0
      %v309 = vand.u32 %v241, 4294901760
      %v310 = vsub.f32 %v241, %v309
      %v311 = vand.u32 %v310, 4294901760
      %v312 = vsub.f32 %v310, %v311
      %v313 = vand.u32 %v312, 4294901760
      %314 = vmatprep.mubr.f32.mxu0 %v313
      %v315 = vand.u32 %v238, 4294901760
      %v316 = vsub.f32 %v238, %v315
      %v317 = vand.u32 %v316, 4294901760
      %v318 = vsub.f32 %v316, %v317
      %v319 = vand.u32 %v318, 4294901760
      %320 = vmatmul.mubr.f32.gmra.mxu0 %v319
      %v321 = vpop.f32.mrf.mxu0
      %v322 = vadd.f32 0.0, %v321
      %v323 = vpop.f32.mrf.mxu0
      %324 = vdwg.mxu0
      %325 = vmatprep.subr.mxu0 0.0
      %326 = vmatpush1.xpose.msra.mxu0 0.0
      %327 = vmatprep.subr.mxu0 0.0
      %328 = vmatpush1.xpose.msra.mxu0 0.0
      %329 = vmatprep.subr.mxu0 0.0
      %330 = vmatpush1.xpose.msra.mxu0 0.0
      %331 = vmatprep.subr.mxu0 0.0
      %332 = vmatpush1.xpose.msra.mxu0 0.0
      %333 = vmatprep.subr.mxu0 0.0
      %334 = vmatpush1.xpose.msra.mxu0 0.0
      %335 = vmatprep.subr.mxu0 0.0
      %336 = vmatpush1.xpose.msra.mxu0 0.0
      %337 = vmatprep.subr.mxu0 0.0
      %338 = vmatpush1.xpose.msra.mxu0 0.0
      %339 = vmatprep.subr.mxu0 0.0
      %340 = vmatpush1.xpose.msra.mxu0 0.0
      %341 = vmatprep.subr.mxu0 0.0
      %342 = vmatpush1.xpose.msra.mxu0 0.0
      %343 = vmatprep.subr.mxu0 0.0
      %344 = vmatpush1.xpose.msra.mxu0 0.0
      %345 = vmatprep.subr.mxu0 0.0
      %346 = vmatpush1.xpose.msra.mxu0 0.0
      %347 = vmatprep.subr.mxu0 0.0
      %348 = vmatpush1.xpose.msra.mxu0 0.0
      %349 = vmatprep.subr.mxu0 0.0
      %350 = vmatpush1.xpose.msra.mxu0 0.0
      %351 = vmatprep.subr.mxu0 0.0
      %352 = vmatpush1.xpose.msra.mxu0 0.0
      %353 = vmatprep.subr.mxu0 0.0
      %354 = vmatpush1.xpose.msra.mxu0 0.0
      %v355 = vand.u32 %v241, 4294901760
      %v356 = vsub.f32 %v241, %v355
      %v357 = vand.u32 %v356, 4294901760
      %v358 = vsub.f32 %v356, %v357
      %v359 = vand.u32 %v358, 4294901760
      %360 = vmatprep.subr.mxu0 %v359
      %v361 = vand.u32 %v238, 4294901760
      %v362 = vsub.f32 %v238, %v361
      %v363 = vand.u32 %v362, 4294901760
      %v364 = vsub.f32 %v362, %v363
      %v365 = vand.u32 %v364, 4294901760
      %366 = vmatpush1.xpose.msra.mxu0 %v365
      %367 = vmatprep.subr.mxu0 0.0
      %368 = vmatpush2.xpose.msra.mxu0 0.0
      %369 = vmatprep.subr.mxu0 0.0
      %370 = vmatpush2.xpose.msra.mxu0 0.0
      %371 = vmatprep.subr.mxu0 0.0
      %372 = vmatpush2.xpose.msra.mxu0 0.0
      %373 = vmatprep.subr.mxu0 0.0
      %374 = vmatpush2.xpose.msra.mxu0 0.0
      %375 = vmatprep.subr.mxu0 0.0
      %376 = vmatpush2.xpose.msra.mxu0 0.0
      %377 = vmatprep.subr.mxu0 0.0
      %378 = vmatpush2.xpose.msra.mxu0 0.0
      %379 = vmatprep.subr.mxu0 0.0
      %380 = vmatpush2.xpose.msra.mxu0 0.0
      %381 = vmatprep.subr.mxu0 0.0
      %382 = vmatpush2.xpose.msra.mxu0 0.0
      %383 = vmatprep.subr.mxu0 0.0
      %384 = vmatpush2.xpose.msra.mxu0 0.0
      %385 = vmatprep.subr.mxu0 0.0
      %386 = vmatpush2.xpose.msra.mxu0 0.0
      %387 = vmatprep.subr.mxu0 0.0
      %388 = vmatpush2.xpose.msra.mxu0 0.0
      %389 = vmatprep.subr.mxu0 0.0
      %390 = vmatpush2.xpose.msra.mxu0 0.0
      %391 = vmatprep.subr.mxu0 0.0
      %392 = vmatpush2.xpose.msra.mxu0 0.0
      %393 = vmatprep.subr.mxu0 0.0
      %394 = vmatpush2.xpose.msra.mxu0 0.0
      %395 = vmatprep.subr.mxu0 0.0
      %396 = vmatpush2.xpose.msra.mxu0 0.0
      %397 = vmatprep.subr.mxu0 0.0
      %398 = vmatpush2.xpose.msra.mxu0 0.0
      %v399 = vand.u32 %v241, 4294901760
      %400 = vmatprep.mubr.f32.mxu0 %v399
      %v401 = vand.u32 %v238, 4294901760
      %402 = vmatmul.mubr.f32.gmra.mxu0 %v401
      %v403 = vpop.f32.mrf.mxu0
      %v404 = vadd.f32 %v322, %v403
      %v405 = vpop.f32.mrf.mxu0
      %406 = vdwg.mxu0
      %407 = vmatprep.subr.mxu0 0.0
      %408 = vmatpush1.xpose.msra.mxu0 0.0
      %409 = vmatprep.subr.mxu0 0.0
      %410 = vmatpush1.xpose.msra.mxu0 0.0
      %411 = vmatprep.subr.mxu0 0.0
      %412 = vmatpush1.xpose.msra.mxu0 0.0
      %413 = vmatprep.subr.mxu0 0.0
      %414 = vmatpush1.xpose.msra.mxu0 0.0
      %415 = vmatprep.subr.mxu0 0.0
      %416 = vmatpush1.xpose.msra.mxu0 0.0
      %417 = vmatprep.subr.mxu0 0.0
      %418 = vmatpush1.xpose.msra.mxu0 0.0
      %419 = vmatprep.subr.mxu0 0.0
      %420 = vmatpush1.xpose.msra.mxu0 0.0
      %421 = vmatprep.subr.mxu0 0.0
      %422 = vmatpush1.xpose.msra.mxu0 0.0
      %423 = vmatprep.subr.mxu0 0.0
      %424 = vmatpush1.xpose.msra.mxu0 0.0
      %425 = vmatprep.subr.mxu0 0.0
      %426 = vmatpush1.xpose.msra.mxu0 0.0
      %427 = vmatprep.subr.mxu0 0.0
      %428 = vmatpush1.xpose.msra.mxu0 0.0
      %429 = vmatprep.subr.mxu0 0.0
      %430 = vmatpush1.xpose.msra.mxu0 0.0
      %431 = vmatprep.subr.mxu0 0.0
      %432 = vmatpush1.xpose.msra.mxu0 0.0
      %433 = vmatprep.subr.mxu0 0.0
      %434 = vmatpush1.xpose.msra.mxu0 0.0
      %435 = vmatprep.subr.mxu0 0.0
      %436 = vmatpush1.xpose.msra.mxu0 0.0
      %v437 = vand.u32 %v241, 4294901760
      %v438 = vsub.f32 %v241, %v437
      %439 = vmatprep.subr.mxu0 %v438
      %v440 = vand.u32 %v238, 4294901760
      %v441 = vsub.f32 %v238, %v440
      %442 = vmatpush1.xpose.msra.mxu0 %v441
      %443 = vmatprep.subr.mxu0 0.0
      %444 = vmatpush2.xpose.msra.mxu0 0.0
      %445 = vmatprep.subr.mxu0 0.0
      %446 = vmatpush2.xpose.msra.mxu0 0.0
      %447 = vmatprep.subr.mxu0 0.0
      %448 = vmatpush2.xpose.msra.mxu0 0.0
      %449 = vmatprep.subr.mxu0 0.0
      %450 = vmatpush2.xpose.msra.mxu0 0.0
      %451 = vmatprep.subr.mxu0 0.0
      %452 = vmatpush2.xpose.msra.mxu0 0.0
      %453 = vmatprep.subr.mxu0 0.0
      %454 = vmatpush2.xpose.msra.mxu0 0.0
      %455 = vmatprep.subr.mxu0 0.0
      %456 = vmatpush2.xpose.msra.mxu0 0.0
      %457 = vmatprep.subr.mxu0 0.0
      %458 = vmatpush2.xpose.msra.mxu0 0.0
      %459 = vmatprep.subr.mxu0 0.0
      %460 = vmatpush2.xpose.msra.mxu0 0.0
      %461 = vmatprep.subr.mxu0 0.0
      %462 = vmatpush2.xpose.msra.mxu0 0.0
      %463 = vmatprep.subr.mxu0 0.0
      %464 = vmatpush2.xpose.msra.mxu0 0.0
      %465 = vmatprep.subr.mxu0 0.0
      %466 = vmatpush2.xpose.msra.mxu0 0.0
      %467 = vmatprep.subr.mxu0 0.0
      %468 = vmatpush2.xpose.msra.mxu0 0.0
      %469 = vmatprep.subr.mxu0 0.0
      %470 = vmatpush2.xpose.msra.mxu0 0.0
      %471 = vmatprep.subr.mxu0 0.0
      %472 = vmatpush2.xpose.msra.mxu0 0.0
      %473 = vmatprep.subr.mxu0 0.0
      %474 = vmatpush2.xpose.msra.mxu0 0.0
      %v475 = vand.u32 %v241, 4294901760
      %v476 = vsub.f32 %v241, %v475
      %477 = vmatprep.mubr.f32.mxu0 %v476
      %v478 = vand.u32 %v238, 4294901760
      %v479 = vsub.f32 %v238, %v478
      %480 = vmatmul.mubr.f32.gmra.mxu0 %v479
      %v481 = vpop.f32.mrf.mxu0
      %v482 = vadd.f32 %v404, %v481
      %v483 = vpop.f32.mrf.mxu0
      %484 = vdwg.mxu0
      %485 = vmatprep.subr.mxu0 0.0
      %486 = vmatpush1.xpose.msra.mxu0 0.0
      %487 = vmatprep.subr.mxu0 0.0
      %488 = vmatpush1.xpose.msra.mxu0 0.0
      %489 = vmatprep.subr.mxu0 0.0
      %490 = vmatpush1.xpose.msra.mxu0 0.0
      %491 = vmatprep.subr.mxu0 0.0
      %492 = vmatpush1.xpose.msra.mxu0 0.0
      %493 = vmatprep.subr.mxu0 0.0
      %494 = vmatpush1.xpose.msra.mxu0 0.0
      %495 = vmatprep.subr.mxu0 0.0
      %496 = vmatpush1.xpose.msra.mxu0 0.0
      %497 = vmatprep.subr.mxu0 0.0
      %498 = vmatpush1.xpose.msra.mxu0 0.0
      %499 = vmatprep.subr.mxu0 0.0
      %500 = vmatpush1.xpose.msra.mxu0 0.0
      %501 = vmatprep.subr.mxu0 0.0
      %502 = vmatpush1.xpose.msra.mxu0 0.0
      %503 = vmatprep.subr.mxu0 0.0
      %504 = vmatpush1.xpose.msra.mxu0 0.0
      %505 = vmatprep.subr.mxu0 0.0
      %506 = vmatpush1.xpose.msra.mxu0 0.0
      %507 = vmatprep.subr.mxu0 0.0
      %508 = vmatpush1.xpose.msra.mxu0 0.0
      %509 = vmatprep.subr.mxu0 0.0
      %510 = vmatpush1.xpose.msra.mxu0 0.0
      %511 = vmatprep.subr.mxu0 0.0
      %512 = vmatpush1.xpose.msra.mxu0 0.0
      %513 = vmatprep.subr.mxu0 0.0
      %514 = vmatpush1.xpose.msra.mxu0 0.0
      %v515 = vand.u32 %v241, 4294901760
      %516 = vmatprep.subr.mxu0 %v515
      %v517 = vand.u32 %v238, 4294901760
      %518 = vmatpush1.xpose.msra.mxu0 %v517
      %519 = vmatprep.subr.mxu0 0.0
      %520 = vmatpush2.xpose.msra.mxu0 0.0
      %521 = vmatprep.subr.mxu0 0.0
      %522 = vmatpush2.xpose.msra.mxu0 0.0
      %523 = vmatprep.subr.mxu0 0.0
      %524 = vmatpush2.xpose.msra.mxu0 0.0
      %525 = vmatprep.subr.mxu0 0.0
      %526 = vmatpush2.xpose.msra.mxu0 0.0
      %527 = vmatprep.subr.mxu0 0.0
      %528 = vmatpush2.xpose.msra.mxu0 0.0
      %529 = vmatprep.subr.mxu0 0.0
      %530 = vmatpush2.xpose.msra.mxu0 0.0
      %531 = vmatprep.subr.mxu0 0.0
      %532 = vmatpush2.xpose.msra.mxu0 0.0
      %533 = vmatprep.subr.mxu0 0.0
      %534 = vmatpush2.xpose.msra.mxu0 0.0
      %535 = vmatprep.subr.mxu0 0.0
      %536 = vmatpush2.xpose.msra.mxu0 0.0
      %537 = vmatprep.subr.mxu0 0.0
      %538 = vmatpush2.xpose.msra.mxu0 0.0
      %539 = vmatprep.subr.mxu0 0.0
      %540 = vmatpush2.xpose.msra.mxu0 0.0
      %541 = vmatprep.subr.mxu0 0.0
      %542 = vmatpush2.xpose.msra.mxu0 0.0
      %543 = vmatprep.subr.mxu0 0.0
      %544 = vmatpush2.xpose.msra.mxu0 0.0
      %545 = vmatprep.subr.mxu0 0.0
      %546 = vmatpush2.xpose.msra.mxu0 0.0
      %547 = vmatprep.subr.mxu0 0.0
      %548 = vmatpush2.xpose.msra.mxu0 0.0
      %549 = vmatprep.subr.mxu0 0.0
      %550 = vmatpush2.xpose.msra.mxu0 0.0
      %v551 = vand.u32 %v241, 4294901760
      %v552 = vsub.f32 %v241, %v551
      %v553 = vand.u32 %v552, 4294901760
      %554 = vmatprep.mubr.f32.mxu0 %v553
      %v555 = vand.u32 %v238, 4294901760
      %v556 = vsub.f32 %v238, %v555
      %v557 = vand.u32 %v556, 4294901760
      %558 = vmatmul.mubr.f32.gmra.mxu0 %v557
      %v559 = vpop.f32.mrf.mxu0
      %v560 = vadd.f32 %v482, %v559
      %v561 = vpop.f32.mrf.mxu0
      %562 = vdwg.mxu0
      %563 = vmatprep.subr.mxu0 0.0
      %564 = vmatpush1.xpose.msra.mxu0 0.0
      %565 = vmatprep.subr.mxu0 0.0
      %566 = vmatpush1.xpose.msra.mxu0 0.0
      %567 = vmatprep.subr.mxu0 0.0
      %568 = vmatpush1.xpose.msra.mxu0 0.0
      %569 = vmatprep.subr.mxu0 0.0
      %570 = vmatpush1.xpose.msra.mxu0 0.0
      %571 = vmatprep.subr.mxu0 0.0
      %572 = vmatpush1.xpose.msra.mxu0 0.0
      %573 = vmatprep.subr.mxu0 0.0
      %574 = vmatpush1.xpose.msra.mxu0 0.0
      %575 = vmatprep.subr.mxu0 0.0
      %576 = vmatpush1.xpose.msra.mxu0 0.0
      %577 = vmatprep.subr.mxu0 0.0
      %578 = vmatpush1.xpose.msra.mxu0 0.0
      %579 = vmatprep.subr.mxu0 0.0
      %580 = vmatpush1.xpose.msra.mxu0 0.0
      %581 = vmatprep.subr.mxu0 0.0
      %582 = vmatpush1.xpose.msra.mxu0 0.0
      %583 = vmatprep.subr.mxu0 0.0
      %584 = vmatpush1.xpose.msra.mxu0 0.0
      %585 = vmatprep.subr.mxu0 0.0
      %586 = vmatpush1.xpose.msra.mxu0 0.0
      %587 = vmatprep.subr.mxu0 0.0
      %588 = vmatpush1.xpose.msra.mxu0 0.0
      %589 = vmatprep.subr.mxu0 0.0
      %590 = vmatpush1.xpose.msra.mxu0 0.0
      %591 = vmatprep.subr.mxu0 0.0
      %592 = vmatpush1.xpose.msra.mxu0 0.0
      %v593 = vand.u32 %v241, 4294901760
      %v594 = vsub.f32 %v241, %v593
      %v595 = vand.u32 %v594, 4294901760
      %596 = vmatprep.subr.mxu0 %v595
      %v597 = vand.u32 %v238, 4294901760
      %v598 = vsub.f32 %v238, %v597
      %v599 = vand.u32 %v598, 4294901760
      %600 = vmatpush1.xpose.msra.mxu0 %v599
      %601 = vmatprep.subr.mxu0 0.0
      %602 = vmatpush2.xpose.msra.mxu0 0.0
      %603 = vmatprep.subr.mxu0 0.0
      %604 = vmatpush2.xpose.msra.mxu0 0.0
      %605 = vmatprep.subr.mxu0 0.0
      %606 = vmatpush2.xpose.msra.mxu0 0.0
      %607 = vmatprep.subr.mxu0 0.0
      %608 = vmatpush2.xpose.msra.mxu0 0.0
      %609 = vmatprep.subr.mxu0 0.0
      %610 = vmatpush2.xpose.msra.mxu0 0.0
      %611 = vmatprep.subr.mxu0 0.0
      %612 = vmatpush2.xpose.msra.mxu0 0.0
      %613 = vmatprep.subr.mxu0 0.0
      %614 = vmatpush2.xpose.msra.mxu0 0.0
      %615 = vmatprep.subr.mxu0 0.0
      %616 = vmatpush2.xpose.msra.mxu0 0.0
      %617 = vmatprep.subr.mxu0 0.0
      %618 = vmatpush2.xpose.msra.mxu0 0.0
      %619 = vmatprep.subr.mxu0 0.0
      %620 = vmatpush2.xpose.msra.mxu0 0.0
      %621 = vmatprep.subr.mxu0 0.0
      %622 = vmatpush2.xpose.msra.mxu0 0.0
      %623 = vmatprep.subr.mxu0 0.0
      %624 = vmatpush2.xpose.msra.mxu0 0.0
      %625 = vmatprep.subr.mxu0 0.0
      %626 = vmatpush2.xpose.msra.mxu0 0.0
      %627 = vmatprep.subr.mxu0 0.0
      %628 = vmatpush2.xpose.msra.mxu0 0.0
      %629 = vmatprep.subr.mxu0 0.0
      %630 = vmatpush2.xpose.msra.mxu0 0.0
      %631 = vmatprep.subr.mxu0 0.0
      %632 = vmatpush2.xpose.msra.mxu0 0.0
      %v633 = vand.u32 %v241, 4294901760
      %634 = vmatprep.mubr.f32.mxu0 %v633
      %v635 = vand.u32 %v238, 4294901760
      %636 = vmatmul.mubr.f32.gmra.mxu0 %v635
      %v637 = vpop.f32.mrf.mxu0
      %v638 = vadd.f32 %v560, %v637
      %v639 = vpop.f32.mrf.mxu0
      %640 = vdwg.mxu0
      %641 = vmatprep.subr.mxu0 0.0
      %642 = vmatpush1.xpose.msra.mxu0 0.0
      %643 = vmatprep.subr.mxu0 0.0
      %644 = vmatpush1.xpose.msra.mxu0 0.0
      %645 = vmatprep.subr.mxu0 0.0
      %646 = vmatpush1.xpose.msra.mxu0 0.0
      %647 = vmatprep.subr.mxu0 0.0
      %648 = vmatpush1.xpose.msra.mxu0 0.0
      %649 = vmatprep.subr.mxu0 0.0
      %650 = vmatpush1.xpose.msra.mxu0 0.0
      %651 = vmatprep.subr.mxu0 0.0
      %652 = vmatpush1.xpose.msra.mxu0 0.0
      %653 = vmatprep.subr.mxu0 0.0
      %654 = vmatpush1.xpose.msra.mxu0 0.0
      %655 = vmatprep.subr.mxu0 0.0
      %656 = vmatpush1.xpose.msra.mxu0 0.0
      %657 = vmatprep.subr.mxu0 0.0
      %658 = vmatpush1.xpose.msra.mxu0 0.0
      %659 = vmatprep.subr.mxu0 0.0
      %660 = vmatpush1.xpose.msra.mxu0 0.0
      %661 = vmatprep.subr.mxu0 0.0
      %662 = vmatpush1.xpose.msra.mxu0 0.0
      %663 = vmatprep.subr.mxu0 0.0
      %664 = vmatpush1.xpose.msra.mxu0 0.0
      %665 = vmatprep.subr.mxu0 0.0
      %666 = vmatpush1.xpose.msra.mxu0 0.0
      %667 = vmatprep.subr.mxu0 0.0
      %668 = vmatpush1.xpose.msra.mxu0 0.0
      %669 = vmatprep.subr.mxu0 0.0
      %670 = vmatpush1.xpose.msra.mxu0 0.0
      %v671 = vand.u32 %v241, 4294901760
      %672 = vmatprep.subr.mxu0 %v671
      %v673 = vand.u32 %v238, 4294901760
      %674 = vmatpush1.xpose.msra.mxu0 %v673
      %675 = vmatprep.subr.mxu0 0.0
      %676 = vmatpush2.xpose.msra.mxu0 0.0
      %677 = vmatprep.subr.mxu0 0.0
      %678 = vmatpush2.xpose.msra.mxu0 0.0
      %679 = vmatprep.subr.mxu0 0.0
      %680 = vmatpush2.xpose.msra.mxu0 0.0
      %681 = vmatprep.subr.mxu0 0.0
      %682 = vmatpush2.xpose.msra.mxu0 0.0
      %683 = vmatprep.subr.mxu0 0.0
      %684 = vmatpush2.xpose.msra.mxu0 0.0
      %685 = vmatprep.subr.mxu0 0.0
      %686 = vmatpush2.xpose.msra.mxu0 0.0
      %687 = vmatprep.subr.mxu0 0.0
      %688 = vmatpush2.xpose.msra.mxu0 0.0
      %689 = vmatprep.subr.mxu0 0.0
      %690 = vmatpush2.xpose.msra.mxu0 0.0
      %691 = vmatprep.subr.mxu0 0.0
      %692 = vmatpush2.xpose.msra.mxu0 0.0
      %693 = vmatprep.subr.mxu0 0.0
      %694 = vmatpush2.xpose.msra.mxu0 0.0
      %695 = vmatprep.subr.mxu0 0.0
      %696 = vmatpush2.xpose.msra.mxu0 0.0
      %697 = vmatprep.subr.mxu0 0.0
      %698 = vmatpush2.xpose.msra.mxu0 0.0
      %699 = vmatprep.subr.mxu0 0.0
      %700 = vmatpush2.xpose.msra.mxu0 0.0
      %701 = vmatprep.subr.mxu0 0.0
      %702 = vmatpush2.xpose.msra.mxu0 0.0
      %703 = vmatprep.subr.mxu0 0.0
      %704 = vmatpush2.xpose.msra.mxu0 0.0
      %705 = vmatprep.subr.mxu0 0.0
      %706 = vmatpush2.xpose.msra.mxu0 0.0
      %v707 = vand.u32 %v241, 4294901760
      %708 = vmatprep.mubr.f32.mxu0 %v707
      %v709 = vand.u32 %v238, 4294901760
      %710 = vmatmul.mubr.f32.gmra.mxu0 %v709
      %v711 = vpop.f32.mrf.mxu0
      %v712 = vadd.f32 %v638, %v711
      %v713 = vpop.f32.mrf.mxu0
      %714 = vdwg.mxu0
      %v716 = vlaneseq
      %v717 = vshrl.u32 %v716, 7
      %v718 = vsub.s32 0, %v717
      %v719 = vrot.slane %v239, %v718
      %v720 = vlaneseq
      %v721 = vshrl.u32 %v720, 7
      %v722 = vsub.s32 1, %v721
      %v723 = vrot.slane %v239, %v722
      %v724 = vcombine.low %v719, %v723
      %v726 = vmul.f32 %v238, %v724
      %v728 = vcombine.high %v726, %v726
      %vm730 = vcmask 1043456
      %v731 = vsel %vm730, %v726, 0.0
      %v732 = vsel %vm730, %v728, 0.0
      %v733 = vadd.f32 %v731, %v732
      %734 = vadd.xlane.f32.xlu0 %v733
      %v735 = vpop.xlane.xlu0 %734
      %v736 = vmul.f32 %v239, %v239
      %v738 = vlaneseq
      %v739 = vshrl.u32 %v738, 7
      %v740 = vsub.s32 0, %v739
      %v741 = vrot.slane %v736, %v740
      %v742 = vlaneseq
      %v743 = vshrl.u32 %v742, 7
      %v744 = vsub.s32 1, %v743
      %v745 = vrot.slane %v736, %v744
      %vm748 = vcmask 1040384
      %v749 = vsel %vm748, %v741, 0.0
      %v750 = vsel %vm748, %v745, 0.0
      %v751 = vadd.f32 %v749, %v750
      %752 = vadd.xlane.f32.xlu0 %v751
      %v753 = vpop.xlane.xlu0 %752
      %v754 = vsel %vm730, %v238, 0.0
      %v755 = vsel %vm730, %v241, 0.0
      %v756 = vadd.f32 %v754, %v755
      %757 = vadd.xlane.f32.xlu0 %v756
      %v758 = vpop.xlane.xlu0 %757
      %v761 = vsel %vm748, %v719, 0.0
      %v762 = vsel %vm748, %v723, 0.0
      %v763 = vadd.f32 %v761, %v762
      %764 = vadd.xlane.f32.xlu0 %v763
      %v765 = vpop.xlane.xlu0 %764
      %v766 = vld [vmem:[#allocation2] sm:$0xf]
      %v767 = vadd.f32 %v766, %v712
      %vm768 = vcmask 27648
      %769 = vst.msk [vmem:[#allocation2] sm:$0xf] %vm768, %v767
      %v770 = vld [vmem:[#allocation2] sm:$0xf]
      %v771 = vadd.f32 %v770, %v735
      %vm772 = vcmask 35872
      %773 = vst.msk [vmem:[#allocation2] sm:$0xf] %vm772, %v771
      %v774 = vld [vmem:[#allocation2 + $0x4] sm:$0x1]
      %v775 = vadd.f32 %v774, %v753
      %vm776 = vcmask 32800
      %777 = vst.msk [vmem:[#allocation2 + $0x4] sm:$0x1] %vm776, %v775
      %v778 = vld [vmem:[#allocation2] sm:$0xf]
      %v779 = vadd.f32 %v778, %v758
      %vm780 = vcmask 44072
      %781 = vst.msk [vmem:[#allocation2] sm:$0xf] %vm780, %v779
      %v782 = vld [vmem:[#allocation2 + $0x4] sm:$0x1]
      %v783 = vadd.f32 %v782, %v765
      %vm784 = vcmask 41000
      %785 = vst.msk [vmem:[#allocation2 + $0x4] sm:$0x1] %vm784, %v783
      %v786 = vld [vmem:[#allocation2 + $0x5] sm:$0x1]
      %v787 = vadd.f32 %v786, 256.0
      %788 = vst.msk [vmem:[#allocation2 + $0x5] sm:$0x1] %vm784, %v787
      // Predicated region
      $region33: #{qnr_loss.2} parent=27 // pred_check
        %p789 = pneg %p232
      $region34: #{qnr_loss.2} parent=27 // pred_check_branch
        %791 = sbr.rel (%p789) target = $region36
      $region35: #{qnr_loss.2} parent=27 // pred_region
        %v792 = vld [vmem:[#allocation2] sm:$0xff]
        %vm793 = vcmask 64512
        %794 = vst.msk [vmem:[%s231] sm:$0xff] %vm793, %v792
      $region36: #{qnr_loss.2} parent=27 // pred_fallthru
        _
      %p795 = scmp.lt.s32.totalorder %s18, 1
      %s796 = scalar_select %p795, %s18, 1
      %p797 = scmp.lt.s32.totalorder %s19, 0
      %s798 = scalar_select %p797, %s19, 0
      %s799 = sadd.s32 %s798, %s796
      %s800 = smul.addr %s799, 8
      %s801 = scalar_lea.vmem %s2, %s800
      // Predicated region
      $region37: #{qnr_loss.2} parent=27 // pred_check
        %p802 = pneg %p112
      $region38: #{qnr_loss.2} parent=27 // pred_check_branch
        %804 = sbr.rel (%p802) target = $region40
      $region39: #{qnr_loss.2} parent=27 // pred_region
        _
      $region40: #{qnr_loss.2} parent=27 // pred_fallthru
        _
    $region28: #{qnr_loss.2} parent=5 // pred_fallthru
      _
    %p805 = scmp.le.s32.totalorder 2, %s8
    // Predicated region
    $region41: #{qnr_loss.2} parent=5 // pred_check
      %p806 = pneg %p805
    $region42: #{qnr_loss.2} parent=5 // pred_check_branch
      %808 = sbr.rel (%p806) target = $region44
    $region43: #{qnr_loss.2} parent=5 // pred_region
      %s809 = ssub.s32 %s8, 2
      // Predicated region
      $region45: #{qnr_loss.2} parent=43 // pred_check
        %p810 = pneg %p118
      $region46: #{qnr_loss.2} parent=43 // pred_check_branch
        %812 = sbr.rel (%p810) target = $region48
      $region47: #{qnr_loss.2} parent=43 // pred_region
        %p813 = scmp.lt.s32.totalorder %s21, 1
        %s814 = scalar_select %p813, %s21, 1
        %p815 = scmp.lt.s32.totalorder %s22, 0
        %s816 = scalar_select %p815, %s22, 0
        %s817 = sadd.s32 %s816, %s814
        %s818 = smul.addr %s817, 8
        %s819 = scalar_lea.vmem %s2, %s818
      $region48: #{qnr_loss.2} parent=43 // pred_fallthru
        _
    $region44: #{qnr_loss.2} parent=5 // pred_fallthru
      _
  $region6: #{qnr_loss.2} parent=0 // loop_footer
    %s12 = sadd.s32 1, %s8
  $region7: #{qnr_loss.2} parent=0 // loop_footer_branch
    %7 = sbr.rel target = $region3
  $region8: #{qnr_loss.2} parent=0 // loop_exit
    _

</llo_original>
